<compile_context>
chip_gen: v5e
topology: v5e:2x2
jax: 0.10.0
libtpu: 0.0.40
codegen_flags: <defaults>
</compile_context>

<pallas_src>
import functools

import jax
import jax.numpy as jnp
from jax import lax
from jax.experimental import pallas as pl
from jax.experimental.pallas import tpu as pltpu


def _attention_kernel(x_ref, wqkv_ref, wout_ref, bout_ref, o_ref, att_ref, *,
                      heads, dim_head, n_valid):
    # x_ref:    (N_pad, dim)      bf16, pipelined per batch element
    # wqkv_ref: (dim, 3*inner)    bf16, resident in VMEM (Q columns pre-scaled)
    # wout_ref: (inner, dim)      bf16, resident in VMEM
    # bout_ref: (1, dim)          f32,  resident in VMEM
    # o_ref:    (N_pad, dim)      output block
    # att_ref:  (N_pad, inner)    bf16 VMEM scratch (merged per-head outputs)
    inner = heads * dim_head
    n_pad = x_ref.shape[0]

    # QKV projection: bf16 MXU inputs, f32 accumulation, single bf16 cast.
    qkv = jnp.dot(x_ref[...], wqkv_ref[...],
                  preferred_element_type=jnp.float32).astype(jnp.bfloat16)

    # Key-padding mask (static: only generated when padding exists).
    if n_valid < n_pad:
        key_mask = lax.broadcasted_iota(jnp.int32, (1, n_pad), 1) < n_valid
    else:
        key_mask = None

    for h in range(heads):                      # static unroll, static slices
        lo = h * dim_head
        hi = lo + dim_head
        q = qkv[:, lo:hi]                       # scale already folded into Wq
        k = qkv[:, inner + lo:inner + hi]
        v = qkv[:, 2 * inner + lo:2 * inner + hi]

        # scores = q @ k^T   (bf16 in, f32 accumulate)
        s = lax.dot_general(q, k, (((1,), (1,)), ((), ())),
                            preferred_element_type=jnp.float32)      # (N_pad, N_pad)
        if key_mask is not None:
            s = jnp.where(key_mask, s, jnp.float32(-1e30))

        m = jnp.max(s, axis=-1, keepdims=True)
        p = jnp.exp(s - m)                                            # f32, unnormalized
        denom = jnp.sum(p, axis=-1, keepdims=True)                    # (N_pad, 1)

        pv = jnp.dot(p.astype(jnp.bfloat16), v,
                     preferred_element_type=jnp.float32)              # (N_pad, d)
        # Deferred normalization on the small (N, d) tensor, EUP reciprocal.
        out_h = pv * pl.reciprocal(denom, approx=True)
        att_ref[:, lo:hi] = out_h.astype(jnp.bfloat16)

    # Output projection: one full-depth (inner-deep) MXU matmul + bias.
    y = jnp.dot(att_ref[...], wout_ref[...], preferred_element_type=jnp.float32)
    y = y + bout_ref[...]
    o_ref[...] = y.astype(o_ref.dtype)


def attention(x, wqkv, wout, bout, *, heads, dim_head):
    """ViT attention forward.

    x: (B, N, dim); wqkv: (dim, 3*heads*dim_head)  [Linear weight, transposed];
    wout: (heads*dim_head, dim); bout: (dim,).
    Implements the project_out=True path (pass identity wout / zero bout for the
    heads==1 and dim_head==dim Identity configuration).
    """
    B, N, dim = x.shape
    inner = heads * dim_head
    assert wqkv.shape == (dim, 3 * inner)
    assert wout.shape == (inner, dim)
    assert bout.shape == (dim,)
    out_dtype = x.dtype
    scale = float(dim_head) ** (-0.5)

    # Pad the sequence to a lane-dense multiple of 128; padded keys are masked
    # inside the kernel, padded query rows are sliced off below.
    N_pad = ((N + 127) // 128) * 128
    if N_pad != N:
        x = jnp.pad(x, ((0, 0), (0, N_pad - N), (0, 0)))

    # bf16 inputs/weights for the MXU; f32 accumulation happens in-kernel.
    x_bf = x.astype(jnp.bfloat16)
    # Fold the softmax scale into the Q columns of Wqkv (free at runtime; exact
    # for power-of-two dim_head).
    wqkv_scaled = wqkv.at[:, :inner].multiply(scale)
    wqkv_bf = wqkv_scaled.astype(jnp.bfloat16)
    wout_bf = wout.astype(jnp.bfloat16)
    bout2 = bout.reshape(1, dim).astype(jnp.float32)

    # Advisory cost estimate for the XLA scheduler.
    flops = (2 * B * N_pad * dim * 3 * inner              # qkv projection
             + 2 * 2 * B * heads * N_pad * N_pad * dim_head   # q@k^T and p@v
             + 2 * B * N_pad * inner * dim)                # output projection
    transcendentals = B * heads * N_pad * N_pad            # softmax exp
    bytes_accessed = (x_bf.size * 2 + wqkv_bf.size * 2 + wout_bf.size * 2
                      + bout2.size * 4
                      + B * N_pad * dim * jnp.dtype(out_dtype).itemsize)

    # Working-set-derived VMEM limit (weights resident + double-buffered x/out
    # blocks + bf16 qkv + bf16 merged-head scratch + one head's f32 scores/p).
    itemsize_out = jnp.dtype(out_dtype).itemsize
    vmem_est = ((dim * 3 * inner + inner * dim) * 2 + dim * 4
                + 2 * N_pad * dim * 2
                + 2 * N_pad * dim * itemsize_out
                + N_pad * 3 * inner * 2
                + N_pad * inner * 2
                + 2 * N_pad * N_pad * 4)
    vmem_limit = int(min(max(2 * vmem_est, 16 * 1024 * 1024), 64 * 1024 * 1024))

    kernel = functools.partial(_attention_kernel, heads=heads,
                               dim_head=dim_head, n_valid=N)

    out_padded = pl.pallas_call(
        kernel,
        out_shape=jax.ShapeDtypeStruct((B, N_pad, dim), out_dtype),
        grid=(B,),
        in_specs=[
            # x: pipelined (double-buffered), one batch element per grid step.
            pl.BlockSpec((None, N_pad, dim), lambda b: (b, 0, 0)),
            # Grid-invariant operands: whole-array VMEM residency, single copy.
            pl.BlockSpec(memory_space=pltpu.MemorySpace.VMEM),   # Wqkv (scaled)
            pl.BlockSpec(memory_space=pltpu.MemorySpace.VMEM),   # Wout
            pl.BlockSpec(memory_space=pltpu.MemorySpace.VMEM),   # b_out
        ],
        out_specs=pl.BlockSpec((None, N_pad, dim), lambda b: (b, 0, 0)),
        scratch_shapes=[pltpu.VMEM((N_pad, inner), jnp.bfloat16)],
        compiler_params=pltpu.CompilerParams(
            dimension_semantics=("parallel",),     # batch axis shards over TCs
            vmem_limit_bytes=vmem_limit,
        ),
        cost_estimate=pl.CostEstimate(flops=int(flops),
                                      transcendentals=int(transcendentals),
                                      bytes_accessed=int(bytes_accessed)),
    )(x_bf, wqkv_bf, wout_bf, bout2)

    return out_padded[:, :N, :]


def _reference(x, wqkv, wout, bout, *, heads, dim_head):
    B, N, dim = x.shape
    inner = heads * dim_head
    qkv = x @ wqkv
    q, k, v = jnp.split(qkv, 3, axis=-1)

    def split_heads(t):
        return t.reshape(B, N, heads, dim_head).transpose(0, 2, 1, 3)

    q, k, v = map(split_heads, (q, k, v))
    dots = jnp.einsum("bhnd,bhmd->bhnm", q, k) * (dim_head ** (-0.5))
    attn = jax.nn.softmax(dots, axis=-1)
    out = jnp.einsum("bhnm,bhmd->bhnd", attn, v)
    out = out.transpose(0, 2, 1, 3).reshape(B, N, inner)
    return out @ wout + bout


if __name__ == "__main__":
    # Small ViT-like config. N=100 is deliberately NOT a multiple of 128 so the
    # pad-to-128 + key-masking path is exercised and checked against the reference.
    B, N, dim = 2, 100, 128
    heads, dim_head = 2, 64
    inner = heads * dim_head

    key = jax.random.PRNGKey(0)
    kx, kqkv, kout, kb = jax.random.split(key, 4)

    x = jax.random.normal(kx, (B, N, dim), dtype=jnp.float32)
    # nn.Linear weights stored transposed as (in_features, out_features).
    wqkv = jax.random.normal(kqkv, (dim, 3 * inner), dtype=jnp.float32) * (dim ** -0.5)
    wout = jax.random.normal(kout, (inner, dim), dtype=jnp.float32) * (inner ** -0.5)
    bout = jax.random.normal(kb, (dim,), dtype=jnp.float32) * 0.01

    out = attention(x, wqkv, wout, bout, heads=heads, dim_head=dim_head)
    out = jax.block_until_ready(out)

    ref = _reference(x, wqkv, wout, bout, heads=heads, dim_head=dim_head)
    assert out.shape == (B, N, dim)
    # bf16 MXU inputs (f32 accumulation) + approx reciprocal -> relaxed tolerance
    # vs the f32 reference (deliberate deviation from the f32 PyTorch module).
    max_err = float(jnp.max(jnp.abs(out - ref)))
    assert jnp.allclose(out, ref, atol=5e-2, rtol=5e-2), \
        f"mismatch vs reference (max|err|={max_err})"
    print("KERNEL_OK")
</pallas_src>

<mosaic_0001>
module attributes {stable_mosaic.version = 11 : i64} {
  func.func @_attention_kernel(%arg0: i32, %arg1: memref<1x128x128xbf16, #tpu.memory_space<vmem>>, %arg2: memref<128x384xbf16, #tpu.memory_space<vmem>>, %arg3: memref<128x128xbf16, #tpu.memory_space<vmem>>, %arg4: memref<1x128xf32, #tpu.memory_space<vmem>>, %arg5: memref<1x128x128xf32, #tpu.memory_space<vmem>>, %arg6: memref<128x128xbf16, #tpu.memory_space<vmem>>) attributes {dimension_semantics = [#tpu.dimension_semantics<parallel>], iteration_bounds = array<i64: 2>, scalar_prefetch = 0 : i64, scratch_operands = 1 : i64, tpu.core_type = #tpu.core_type<tc>, window_params = [{transform_indices = @transform_0, window_bounds = array<i64: 1, 128, 128>}, {pipeline_mode = #tpu.pipeline_mode<synchronous>, transform_indices = @transform_1, window_bounds = array<i64: 128, 384>}, {pipeline_mode = #tpu.pipeline_mode<synchronous>, transform_indices = @transform_2, window_bounds = array<i64: 128, 128>}, {pipeline_mode = #tpu.pipeline_mode<synchronous>, transform_indices = @transform_3, window_bounds = array<i64: 1, 128>}, {transform_indices = @transform_4, window_bounds = array<i64: 1, 128, 128>}]} {
    %c0 = arith.constant 0 : index
    %c0_0 = arith.constant 0 : index
    %c0_1 = arith.constant 0 : index
    %0 = vector.load %arg1[%c0, %c0_0, %c0_1] : memref<1x128x128xbf16, #tpu.memory_space<vmem>>, vector<1x128x128xbf16>
    %1 = vector.shape_cast %0 : vector<1x128x128xbf16> to vector<128x128xbf16>
    %c0_2 = arith.constant 0 : index
    %c0_3 = arith.constant 0 : index
    %2 = vector.load %arg2[%c0_2, %c0_3] : memref<128x384xbf16, #tpu.memory_space<vmem>>, vector<128x384xbf16>
    %cst = arith.constant dense<0.000000e+00> : vector<128x384xf32>
    %3 = tpu.matmul %1, %2, %cst {dimension_numbers = #tpu.dot_dimension_numbers<[1], [0], [0], [1], [0, 0, 1, 1], [], []>} : vector<128x128xbf16>, vector<128x384xbf16>, vector<128x384xf32> -> vector<128x384xf32>
    %4 = arith.truncf %3 : vector<128x384xf32> to vector<128x384xbf16>
    %5 = tpu.iota {dimensions = array<i32: 1>} : vector<1x128xi32>
    %c100_i32 = arith.constant 100 : i32
    %6 = vector.broadcast %c100_i32 : i32 to vector<1x128xi32>
    %7 = arith.cmpi slt, %5, %6 : vector<1x128xi32>
    %8 = vector.extract_strided_slice %4 {offsets = [0, 0], sizes = [128, 64], strides = [1, 1]} : vector<128x384xbf16> to vector<128x64xbf16>
    %9 = vector.extract_strided_slice %4 {offsets = [0, 128], sizes = [128, 64], strides = [1, 1]} : vector<128x384xbf16> to vector<128x64xbf16>
    %10 = vector.extract_strided_slice %4 {offsets = [0, 256], sizes = [128, 64], strides = [1, 1]} : vector<128x384xbf16> to vector<128x64xbf16>
    %cst_4 = arith.constant dense<0.000000e+00> : vector<128x128xf32>
    %11 = tpu.matmul %8, %9, %cst_4 {dimension_numbers = #tpu.dot_dimension_numbers<[1], [1], [0], [0], [0, 0, 1, 0], [], []>} : vector<128x64xbf16>, vector<128x64xbf16>, vector<128x128xf32> -> vector<128x128xf32>
    %cst_5 = arith.constant -1.000000e+30 : f32
    %12 = vector.shape_cast %7 : vector<1x128xi1> to vector<1x128xi1>
    %13 = vector.broadcast %12 : vector<1x128xi1> to vector<128x128xi1>
    %14 = vector.broadcast %cst_5 : f32 to vector<128x128xf32>
    %15 = arith.select %13, %11, %14 : vector<128x128xi1>, vector<128x128xf32>
    %cst_6 = arith.constant dense<0xFF800000> : vector<128xf32>
    %16 = vector.multi_reduction <maximumf>, %15, %cst_6 [1] : vector<128x128xf32> to vector<128xf32>
    %17 = vector.shape_cast %16 : vector<128xf32> to vector<128x1xf32>
    %18 = vector.broadcast %17 : vector<128x1xf32> to vector<128x128xf32>
    %19 = arith.subf %15, %18 : vector<128x128xf32>
    %20 = math.exp %19 : vector<128x128xf32>
    %cst_7 = arith.constant dense<0.000000e+00> : vector<128xf32>
    %21 = vector.multi_reduction <add>, %20, %cst_7 [1] : vector<128x128xf32> to vector<128xf32>
    %22 = vector.shape_cast %21 : vector<128xf32> to vector<128x1xf32>
    %23 = arith.truncf %20 : vector<128x128xf32> to vector<128x128xbf16>
    %cst_8 = arith.constant dense<0.000000e+00> : vector<128x64xf32>
    %24 = tpu.matmul %23, %10, %cst_8 {dimension_numbers = #tpu.dot_dimension_numbers<[1], [0], [0], [1], [0, 0, 1, 1], [], []>} : vector<128x128xbf16>, vector<128x64xbf16>, vector<128x64xf32> -> vector<128x64xf32>
    %25 = tpu.reciprocal %22 {approx = true} : vector<128x1xf32> -> vector<128x1xf32>
    %26 = vector.broadcast %25 : vector<128x1xf32> to vector<128x64xf32>
    %27 = arith.mulf %24, %26 : vector<128x64xf32>
    %28 = arith.truncf %27 : vector<128x64xf32> to vector<128x64xbf16>
    %c0_9 = arith.constant 0 : index
    %c0_10 = arith.constant 0 : index
    %29 = vector.load %arg6[%c0_9, %c0_10] : memref<128x128xbf16, #tpu.memory_space<vmem>>, vector<128x64xbf16>
    tpu.vector_store %arg6[%c0_9, %c0_10], %28 {strides = array<i32>} : memref<128x128xbf16, #tpu.memory_space<vmem>>, vector<128x64xbf16>,
    %30 = vector.extract_strided_slice %4 {offsets = [0, 64], sizes = [128, 64], strides = [1, 1]} : vector<128x384xbf16> to vector<128x64xbf16>
    %31 = vector.extract_strided_slice %4 {offsets = [0, 192], sizes = [128, 64], strides = [1, 1]} : vector<128x384xbf16> to vector<128x64xbf16>
    %32 = vector.extract_strided_slice %4 {offsets = [0, 320], sizes = [128, 64], strides = [1, 1]} : vector<128x384xbf16> to vector<128x64xbf16>
    %cst_11 = arith.constant dense<0.000000e+00> : vector<128x128xf32>
    %33 = tpu.matmul %30, %31, %cst_11 {dimension_numbers = #tpu.dot_dimension_numbers<[1], [1], [0], [0], [0, 0, 1, 0], [], []>} : vector<128x64xbf16>, vector<128x64xbf16>, vector<128x128xf32> -> vector<128x128xf32>
    %cst_12 = arith.constant -1.000000e+30 : f32
    %34 = vector.shape_cast %7 : vector<1x128xi1> to vector<1x128xi1>
    %35 = vector.broadcast %34 : vector<1x128xi1> to vector<128x128xi1>
    %36 = vector.broadcast %cst_12 : f32 to vector<128x128xf32>
    %37 = arith.select %35, %33, %36 : vector<128x128xi1>, vector<128x128xf32>
    %cst_13 = arith.constant dense<0xFF800000> : vector<128xf32>
    %38 = vector.multi_reduction <maximumf>, %37, %cst_13 [1] : vector<128x128xf32> to vector<128xf32>
    %39 = vector.shape_cast %38 : vector<128xf32> to vector<128x1xf32>
    %40 = vector.broadcast %39 : vector<128x1xf32> to vector<128x128xf32>
    %41 = arith.subf %37, %40 : vector<128x128xf32>
    %42 = math.exp %41 : vector<128x128xf32>
    %cst_14 = arith.constant dense<0.000000e+00> : vector<128xf32>
    %43 = vector.multi_reduction <add>, %42, %cst_14 [1] : vector<128x128xf32> to vector<128xf32>
    %44 = vector.shape_cast %43 : vector<128xf32> to vector<128x1xf32>
    %45 = arith.truncf %42 : vector<128x128xf32> to vector<128x128xbf16>
    %cst_15 = arith.constant dense<0.000000e+00> : vector<128x64xf32>
    %46 = tpu.matmul %45, %32, %cst_15 {dimension_numbers = #tpu.dot_dimension_numbers<[1], [0], [0], [1], [0, 0, 1, 1], [], []>} : vector<128x128xbf16>, vector<128x64xbf16>, vector<128x64xf32> -> vector<128x64xf32>
    %47 = tpu.reciprocal %44 {approx = true} : vector<128x1xf32> -> vector<128x1xf32>
    %48 = vector.broadcast %47 : vector<128x1xf32> to vector<128x64xf32>
    %49 = arith.mulf %46, %48 : vector<128x64xf32>
    %50 = arith.truncf %49 : vector<128x64xf32> to vector<128x64xbf16>
    %c0_16 = arith.constant 0 : index
    %c64 = arith.constant 64 : index
    %51 = vector.load %arg6[%c0_16, %c64] : memref<128x128xbf16, #tpu.memory_space<vmem>>, vector<128x64xbf16>
    tpu.vector_store %arg6[%c0_16, %c64], %50 {strides = array<i32>} : memref<128x128xbf16, #tpu.memory_space<vmem>>, vector<128x64xbf16>,
    %c0_17 = arith.constant 0 : index
    %c0_18 = arith.constant 0 : index
    %52 = vector.load %arg6[%c0_17, %c0_18] : memref<128x128xbf16, #tpu.memory_space<vmem>>, vector<128x128xbf16>
    %c0_19 = arith.constant 0 : index
    %c0_20 = arith.constant 0 : index
    %53 = vector.load %arg3[%c0_19, %c0_20] : memref<128x128xbf16, #tpu.memory_space<vmem>>, vector<128x128xbf16>
    %cst_21 = arith.constant dense<0.000000e+00> : vector<128x128xf32>
    %54 = tpu.matmul %52, %53, %cst_21 {dimension_numbers = #tpu.dot_dimension_numbers<[1], [0], [0], [1], [0, 0, 1, 1], [], []>} : vector<128x128xbf16>, vector<128x128xbf16>, vector<128x128xf32> -> vector<128x128xf32>
    %c0_22 = arith.constant 0 : index
    %c0_23 = arith.constant 0 : index
    %55 = vector.load %arg4[%c0_22, %c0_23] : memref<1x128xf32, #tpu.memory_space<vmem>>, vector<1x128xf32>
    %56 = vector.broadcast %55 : vector<1x128xf32> to vector<128x128xf32>
    %57 = arith.addf %54, %56 : vector<128x128xf32>
    %c0_24 = arith.constant 0 : index
    %c0_25 = arith.constant 0 : index
    %c0_26 = arith.constant 0 : index
    %58 = vector.load %arg5[%c0_24, %c0_25, %c0_26] : memref<1x128x128xf32, #tpu.memory_space<vmem>>, vector<1x128x128xf32>
    %59 = vector.shape_cast %58 : vector<1x128x128xf32> to vector<128x128xf32>
    %60 = vector.shape_cast %57 : vector<128x128xf32> to vector<1x128x128xf32>
    tpu.vector_store %arg5[%c0_24, %c0_25, %c0_26], %60 {strides = array<i32>} : memref<1x128x128xf32, #tpu.memory_space<vmem>>, vector<1x128x128xf32>,
    return
  }
  func.func @transform_0(%arg0: i32) -> (i32, i32, i32) {
    %c0_i32 = arith.constant 0 : i32
    %c0_i32_0 = arith.constant 0 : i32
    %c0_i32_1 = arith.constant 0 : i32
    return %arg0, %c0_i32, %c0_i32_0 : i32, i32, i32
  }
  func.func @transform_1(%arg0: i32) -> (i32, i32) {
    %c0_i32 = arith.constant 0 : i32
    %c0_i32_0 = arith.constant 0 : i32
    %c0_i32_1 = arith.constant 0 : i32
    return %c0_i32, %c0_i32_0 : i32, i32
  }
  func.func @transform_2(%arg0: i32) -> (i32, i32) {
    %c0_i32 = arith.constant 0 : i32
    %c0_i32_0 = arith.constant 0 : i32
    %c0_i32_1 = arith.constant 0 : i32
    return %c0_i32, %c0_i32_0 : i32, i32
  }
  func.func @transform_3(%arg0: i32) -> (i32, i32) {
    %c0_i32 = arith.constant 0 : i32
    %c0_i32_0 = arith.constant 0 : i32
    %c0_i32_1 = arith.constant 0 : i32
    return %c0_i32, %c0_i32_0 : i32, i32
  }
  func.func @transform_4(%arg0: i32) -> (i32, i32, i32) {
    %c0_i32 = arith.constant 0 : i32
    %c0_i32_0 = arith.constant 0 : i32
    %c0_i32_1 = arith.constant 0 : i32
    return %arg0, %c0_i32, %c0_i32_0 : i32, i32, i32
  }
}

</mosaic_0001>

<llo_original>
// kernel: tpu_custom_call.1
$region0: #{tpu_custom_call.1}
  #allocation0 [shape = 'u32[]', space=smem, size = 0x4, offset = 0x4, fixed_abs, tag = 'smem constant byte address 0x4 - core index']
  #allocation1 [shape = 'u32[72,128]{1,0:T(1,128)}', space=vmem, size = 0x9000, scoped, tag = 'internal scratch']
  #allocation2 [shape = 'bf16[128,128]{1,0:T(8,128)(2,1)}', space=vmem, size = 0x8000, scoped, tag = 'scratch operand']
  %s0 = inlined_call_operand.hbm [shape: bf16[2,128,128], index: 0, kind: input, shape index: {}]
  %s1 = inlined_call_operand.hbm [shape: bf16[128,384], index: 1, kind: input, shape index: {}]
  %s2 = inlined_call_operand.hbm [shape: bf16[128,128], index: 2, kind: input, shape index: {}]
  %s3 = inlined_call_operand.vmem [shape: f32[1,128], index: 3, kind: input, shape index: {}]
  %s4 = inlined_call_operand.hbm [shape: f32[2,128,128], index: 4, kind: output, shape index: {}]
  %s5 = sld [smem:[#allocation0]]
  $region61: #{tpu_custom_call.1} parent=0
    _
  %s7 = ssub.s32 1, %s5
  %s8 = scalar_select 0, %s7, %s5
  $region1: #{tpu_custom_call.1} parent=0
    #allocation3 [shape = 'u8[65536]{0}', space=vmem, size = 0x10000, scoped, tag = 'input window, operand 0']
    #allocation4 [shape = 's32[2]{0}', space=sflag, size = 0x8, scoped, tag = 'scoped memory for tpu_custom_call.1']
    #allocation5 [shape = 's32[2]{0}', space=sflag, size = 0x8, scoped, tag = 'scoped memory for tpu_custom_call.1']
    #allocation6 [shape = 'u8[98304]{0}', space=vmem, size = 0x18000, scoped, tag = 'input window, operand 1, single buffered']
    #allocation7 [shape = 's32[1]{0}', space=sflag, size = 0x4, scoped, tag = 'scoped memory for tpu_custom_call.1']
    #allocation8 [shape = 'u8[32768]{0}', space=vmem, size = 0x8000, scoped, tag = 'input window, operand 2, single buffered']
    #allocation9 [shape = 'u8[131072]{0}', space=vmem, size = 0x20000, scoped, tag = 'output window, operand 0']
    %9 = vsyncpa [#allocation4], 0
    %s10 = scalar_lea.sflag [#allocation4], 1
    %11 = vsyncpa %s10, 0
    %12 = vsyncpa [#allocation7], 0
    %13 = vsyncpa [#allocation5], 0
    %s14 = scalar_lea.sflag [#allocation5], 1
    %15 = vsyncpa %s14, 0
    loop: start=0, step=1, limit=4
    $region2: #{tpu_custom_call.1} parent=1 // loop_pre_header
      _
    $region3: #{tpu_custom_call.1} parent=1 // loop_header
      %s17 = sphi 0, %s21
      %p18 = scmp.ge.s32.totalorder %s17, 4
      %s27 = sphi 0, %s29
      %s30 = sphi 0, %s27
      %s31 = sphi 0, %s30
      %s47 = sphi 0, %s31
      %s51 = sphi 0, %s51
      %s53 = sphi 0, %s51
      %s54 = sphi 0, %s53
      %s68 = sphi 0, %s54
      %s72 = sphi 0, %s72
      %s74 = sphi 0, %s72
      %s75 = sphi 0, %s74
      %s89 = sphi 0, %s75
      %s93 = sphi 0, %s93
      %s95 = sphi 0, %s93
      %s96 = sphi 0, %s95
      %s110 = sphi 0, %s96
      %s116 = sphi 0, %s118
      %s119 = sphi 0, %s116
      %s120 = sphi 0, %s119
      %s136 = sphi 0, %s120
    $region4: #{tpu_custom_call.1} parent=1 // loop_header_branch
      %20 = sbr.rel (%p18) target = $region8
    $region5: #{tpu_custom_call.1} parent=1 // loop_body
      %s22 = ssub.s32 %s17, 1
      %s23 = ssub.s32 %s17, 2
      %s24 = sadd.s32 %s17, 1
      %s25 = ssub.s32 %s17, %s24
      %p26 = scmp.eq.s32.totalorder %s25, 0
      %s28 = sadd.s32 %s27, 1
      %s29 = scalar_select %p26, %s27, %s28
      %p32 = pneg %p26
      %p33 = scmp.eq.s32.totalorder %s17, 1
      %p34 = por %p32, %p33
      %p35 = scmp.ne.s32.totalorder %s27, %s30
      %p36 = scmp.eq.s32.totalorder %s17, 0
      %p37 = por %p35, %p36
      %p38 = scmp.ne.s32.totalorder %s27, %s30
      %p39 = scmp.eq.s32.totalorder %s22, 1
      %p40 = por %p38, %p39
      %p41 = scmp.ne.s32.totalorder %s30, %s31
      %p42 = scmp.eq.s32.totalorder %s22, 0
      %p43 = por %p41, %p42
      %p44 = scmp.ne.s32.totalorder %s30, %s31
      %p45 = scmp.eq.s32.totalorder %s23, 1
      %p46 = por %p44, %p45
      %p48 = scmp.ne.s32.totalorder %s31, %s47
      %p49 = scmp.eq.s32.totalorder %s23, 0
      %p50 = por %p48, %p49
      %s52 = sadd.s32 %s51, 1
      %p55 = scmp.eq.s32.totalorder %s17, 1
      %p56 = scmp.ne.s32.totalorder %s51, %s53
      %p57 = scmp.eq.s32.totalorder %s17, 0
      %p58 = por %p56, %p57
      %p59 = scmp.ne.s32.totalorder %s51, %s53
      %p60 = scmp.eq.s32.totalorder %s22, 1
      %p61 = por %p59, %p60
      %p62 = scmp.ne.s32.totalorder %s53, %s54
      %p63 = scmp.eq.s32.totalorder %s22, 0
      %p64 = por %p62, %p63
      %p65 = scmp.ne.s32.totalorder %s53, %s54
      %p66 = scmp.eq.s32.totalorder %s23, 1
      %p67 = por %p65, %p66
      %p69 = scmp.ne.s32.totalorder %s54, %s68
      %p70 = scmp.eq.s32.totalorder %s23, 0
      %p71 = por %p69, %p70
      %s73 = sadd.s32 %s72, 1
      %p76 = scmp.eq.s32.totalorder %s17, 1
      %p77 = scmp.ne.s32.totalorder %s72, %s74
      %p78 = scmp.eq.s32.totalorder %s17, 0
      %p79 = por %p77, %p78
      %p80 = scmp.ne.s32.totalorder %s72, %s74
      %p81 = scmp.eq.s32.totalorder %s22, 1
      %p82 = por %p80, %p81
      %p83 = scmp.ne.s32.totalorder %s74, %s75
      %p84 = scmp.eq.s32.totalorder %s22, 0
      %p85 = por %p83, %p84
      %p86 = scmp.ne.s32.totalorder %s74, %s75
      %p87 = scmp.eq.s32.totalorder %s23, 1
      %p88 = por %p86, %p87
      %p90 = scmp.ne.s32.totalorder %s75, %s89
      %p91 = scmp.eq.s32.totalorder %s23, 0
      %p92 = por %p90, %p91
      %s94 = sadd.s32 %s93, 1
      %p97 = scmp.eq.s32.totalorder %s17, 1
      %p98 = scmp.ne.s32.totalorder %s93, %s95
      %p99 = scmp.eq.s32.totalorder %s17, 0
      %p100 = por %p98, %p99
      %p101 = scmp.ne.s32.totalorder %s93, %s95
      %p102 = scmp.eq.s32.totalorder %s22, 1
      %p103 = por %p101, %p102
      %p104 = scmp.ne.s32.totalorder %s95, %s96
      %p105 = scmp.eq.s32.totalorder %s22, 0
      %p106 = por %p104, %p105
      %p107 = scmp.ne.s32.totalorder %s95, %s96
      %p108 = scmp.eq.s32.totalorder %s23, 1
      %p109 = por %p107, %p108
      %p111 = scmp.ne.s32.totalorder %s96, %s110
      %p112 = scmp.eq.s32.totalorder %s23, 0
      %p113 = por %p111, %p112
      %s114 = ssub.s32 %s17, %s24
      %p115 = scmp.eq.s32.totalorder %s114, 0
      %s117 = sadd.s32 %s116, 1
      %s118 = scalar_select %p115, %s116, %s117
      %p121 = pneg %p115
      %p122 = scmp.eq.s32.totalorder %s17, 1
      %p123 = por %p121, %p122
      %p124 = scmp.ne.s32.totalorder %s116, %s119
      %p125 = scmp.eq.s32.totalorder %s17, 0
      %p126 = por %p124, %p125
      %p127 = scmp.ne.s32.totalorder %s116, %s119
      %p128 = scmp.eq.s32.totalorder %s22, 1
      %p129 = por %p127, %p128
      %p130 = scmp.ne.s32.totalorder %s119, %s120
      %p131 = scmp.eq.s32.totalorder %s22, 0
      %p132 = por %p130, %p131
      %p133 = scmp.ne.s32.totalorder %s119, %s120
      %p134 = scmp.eq.s32.totalorder %s23, 1
      %p135 = por %p133, %p134
      %p137 = scmp.ne.s32.totalorder %s120, %s136
      %p138 = scmp.eq.s32.totalorder %s23, 0
      %p139 = por %p137, %p138
      %p140 = scmp.le.s32.totalorder 1, %s17
      %p141 = scmp.lt.s32.totalorder %s17, 3
      %p142 = pnand %p140, %p141
      %p143 = pneg %p142
      // Predicated region
      $region9: #{tpu_custom_call.1} parent=5 // pred_check
        _
      $region10: #{tpu_custom_call.1} parent=5 // pred_check_branch
        %145 = sbr.rel (%p142) target = $region12
      $region11: #{tpu_custom_call.1} parent=5 // pred_region
        %s146 = ssub.s32 %s17, 1
        // Predicated region
        $region13: #{tpu_custom_call.1} parent=11 // pred_check
          %p147 = pneg %p64
        $region14: #{tpu_custom_call.1} parent=11 // pred_check_branch
          %149 = sbr.rel (%p147) target = $region16
        $region15: #{tpu_custom_call.1} parent=11 // pred_region
          %151 = vsyncadd [#allocation7], 0
          %s152 = sshll.u32 %s1, 4
          %s153 = int_to_ptr.hbm [resolvable:$true] %s152
          %s154 = sshll.u32 [#allocation6], 4
          %s155 = int_to_ptr.vmem [resolvable:$true] %s154
          %160 = dma.hbm_to_vmem [thread:$0]  %s153, 3072, %s155, [#allocation7], 192, 192, 12
        $region16: #{tpu_custom_call.1} parent=11 // pred_fallthru
          _
        // Predicated region
        $region17: #{tpu_custom_call.1} parent=11 // pred_check
          %p161 = pneg %p85
        $region18: #{tpu_custom_call.1} parent=11 // pred_check_branch
          %163 = sbr.rel (%p161) target = $region20
        $region19: #{tpu_custom_call.1} parent=11 // pred_region
          %165 = vsyncadd [#allocation7], 0
          %s166 = sshll.u32 %s2, 4
          %s167 = int_to_ptr.hbm [resolvable:$true] %s166
          %s168 = sshll.u32 [#allocation8], 4
          %s169 = int_to_ptr.vmem [resolvable:$true] %s168
          %174 = dma.hbm_to_vmem [thread:$0]  %s167, 1024, %s169, [#allocation7], 64, 64, 4
        $region20: #{tpu_custom_call.1} parent=11 // pred_fallthru
          _
        // Predicated region
        $region21: #{tpu_custom_call.1} parent=11 // pred_check
          %p175 = pneg %p106
        $region22: #{tpu_custom_call.1} parent=11 // pred_check_branch
          %177 = sbr.rel (%p175) target = $region24
        $region23: #{tpu_custom_call.1} parent=11 // pred_region
          _
        $region24: #{tpu_custom_call.1} parent=11 // pred_fallthru
          _
      $region12: #{tpu_custom_call.1} parent=5 // pred_fallthru
        _
      %p178 = scmp.lt.s32.totalorder %s17, 2
      // Predicated region
      $region25: #{tpu_custom_call.1} parent=5 // pred_check
        %p179 = pneg %p178
      $region26: #{tpu_custom_call.1} parent=5 // pred_check_branch
        %181 = sbr.rel (%p179) target = $region28
      $region27: #{tpu_custom_call.1} parent=5 // pred_region
        // Predicated region
        $region29: #{tpu_custom_call.1} parent=27 // pred_check
          %p182 = pneg %p37
        $region30: #{tpu_custom_call.1} parent=27 // pred_check_branch
          %184 = sbr.rel (%p182) target = $region32
        $region31: #{tpu_custom_call.1} parent=27 // pred_region
          %s185 = sand.u32 %s27, 1
          %s186 = scalar_lea.sflag [#allocation4], %s185
          %s187 = sand.u32 %s27, 1
          %s188 = smul.addr %s187, 64
          %s189 = scalar_lea.vmem [#allocation3], %s188
          %191 = vsyncadd %s186, 0
          %s192 = smul.addr %s17, 16
          %s193 = smul.addr %s192, 4
          %s194 = scalar_lea.hbm %s0, %s193
          %s195 = sshll.u32 %s194, 4
          %s196 = int_to_ptr.hbm [resolvable:$true] %s195
          %s197 = sshll.u32 %s189, 4
          %s198 = int_to_ptr.vmem [resolvable:$true] %s197
          %203 = dma.hbm_to_vmem [thread:$0]  %s196, 1024, %s198, %s186, 64, 64, 4
        $region32: #{tpu_custom_call.1} parent=27 // pred_fallthru
          _
      $region28: #{tpu_custom_call.1} parent=5 // pred_fallthru
        _
      %p204 = scmp.le.s32.totalorder 1, %s17
      %p205 = scmp.lt.s32.totalorder %s17, 3
      %p206 = pnand %p204, %p205
      %p207 = pneg %p206
      // Predicated region
      $region33: #{tpu_custom_call.1} parent=5 // pred_check
        _
      $region34: #{tpu_custom_call.1} parent=5 // pred_check_branch
        %209 = sbr.rel (%p206) target = $region36
      $region35: #{tpu_custom_call.1} parent=5 // pred_region
        %s210 = ssub.s32 %s17, 1
        %s211 = sand.u32 %s30, 1
        %s212 = scalar_lea.sflag [#allocation4], %s211
        %s213 = sand.u32 %s30, 1
        %s214 = smul.addr %s213, 64
        %s215 = scalar_lea.vmem [#allocation3], %s214
        // Predicated region
        $region37: #{tpu_custom_call.1} parent=35 // pred_check
          %p216 = pneg %p43
        $region38: #{tpu_custom_call.1} parent=35 // pred_check_branch
          %218 = sbr.rel (%p216) target = $region40
        $region39: #{tpu_custom_call.1} parent=35 // pred_region
          %220 = dma.done %s212, 1024
        $region40: #{tpu_custom_call.1} parent=35 // pred_fallthru
          _
        // Predicated region
        $region41: #{tpu_custom_call.1} parent=35 // pred_check
          %p221 = pneg %p64
        $region42: #{tpu_custom_call.1} parent=35 // pred_check_branch
          %223 = sbr.rel (%p221) target = $region44
        $region43: #{tpu_custom_call.1} parent=35 // pred_region
          %225 = dma.done [#allocation7], 3072
        $region44: #{tpu_custom_call.1} parent=35 // pred_fallthru
          _
        // Predicated region
        $region45: #{tpu_custom_call.1} parent=35 // pred_check
          %p226 = pneg %p85
        $region46: #{tpu_custom_call.1} parent=35 // pred_check_branch
          %228 = sbr.rel (%p226) target = $region48
        $region47: #{tpu_custom_call.1} parent=35 // pred_region
          %230 = dma.done [#allocation7], 1024
        $region48: #{tpu_custom_call.1} parent=35 // pred_fallthru
          _
        %s231 = sand.u32 %s30, 1
        %s232 = scalar_lea.sflag [#allocation4], %s231
        %s233 = sand.u32 %s30, 1
        %s234 = smul.addr %s233, 64
        %s235 = scalar_lea.vmem [#allocation3], %s234
        %p236 = pneg %p43
        %p237 = pneg %p40
        %p238 = pneg %p64
        %p239 = pneg %p61
        %p240 = pneg %p85
        %p241 = pneg %p82
        %p242 = pneg %p106
        %p243 = pneg %p103
        %p244 = pneg %p132
        %p245 = pneg %p129
        %s246 = sand.u32 %s119, 1
        %s247 = scalar_lea.sflag [#allocation5], %s246
        %s248 = sand.u32 %s119, 1
        %s249 = smul.addr %s248, 128
        %s250 = scalar_lea.vmem [#allocation9], %s249
        %v251 = vld [vmem:[%s215] sm:$0xf]
        %v252 = vld [vmem:[%s215 + $0x4] sm:$0xf]
        %v253 = vld [vmem:[%s215 + $0x8] sm:$0xf]
        %v254 = vld [vmem:[%s215 + $0xc] sm:$0xf]
        %v255 = vld [vmem:[%s215 + $0x10] sm:$0xf]
        %v256 = vld [vmem:[%s215 + $0x14] sm:$0xf]
        %v257 = vld [vmem:[%s215 + $0x18] sm:$0xf]
        %v258 = vld [vmem:[%s215 + $0x1c] sm:$0xf]
        %v259 = vld [vmem:[%s215 + $0x20] sm:$0xf]
        %v260 = vld [vmem:[%s215 + $0x24] sm:$0xf]
        %v261 = vld [vmem:[%s215 + $0x28] sm:$0xf]
        %v262 = vld [vmem:[%s215 + $0x2c] sm:$0xf]
        %v263 = vld [vmem:[%s215 + $0x30] sm:$0xf]
        %v264 = vld [vmem:[%s215 + $0x34] sm:$0xf]
        %v265 = vld [vmem:[%s215 + $0x38] sm:$0xf]
        %v266 = vld [vmem:[%s215 + $0x3c] sm:$0xf]
        %v267 = vld [vmem:[#allocation6] sm:$0xff]
        %v268 = vld [vmem:[#allocation6 + $0x8] sm:$0xf]
        %v269 = vld [vmem:[#allocation6 + $0xc] sm:$0xff]
        %v270 = vld [vmem:[#allocation6 + $0x14] sm:$0xf]
        %v271 = vld [vmem:[#allocation6 + $0x18] sm:$0xff]
        %v272 = vld [vmem:[#allocation6 + $0x20] sm:$0xf]
        %v273 = vld [vmem:[#allocation6 + $0x24] sm:$0xff]
        %v274 = vld [vmem:[#allocation6 + $0x2c] sm:$0xf]
        %v275 = vld [vmem:[#allocation6 + $0x30] sm:$0xff]
        %v276 = vld [vmem:[#allocation6 + $0x38] sm:$0xf]
        %v277 = vld [vmem:[#allocation6 + $0x3c] sm:$0xff]
        %v278 = vld [vmem:[#allocation6 + $0x44] sm:$0xf]
        %v279 = vld [vmem:[#allocation6 + $0x48] sm:$0xff]
        %v280 = vld [vmem:[#allocation6 + $0x50] sm:$0xf]
        %v281 = vld [vmem:[#allocation6 + $0x54] sm:$0xff]
        %v282 = vld [vmem:[#allocation6 + $0x5c] sm:$0xf]
        %v283 = vld [vmem:[#allocation6 + $0x60] sm:$0xff]
        %v284 = vld [vmem:[#allocation6 + $0x68] sm:$0xf]
        %v285 = vld [vmem:[#allocation6 + $0x6c] sm:$0xff]
        %v286 = vld [vmem:[#allocation6 + $0x74] sm:$0xf]
        %v287 = vld [vmem:[#allocation6 + $0x78] sm:$0xff]
        %v288 = vld [vmem:[#allocation6 + $0x80] sm:$0xf]
        %v289 = vld [vmem:[#allocation6 + $0x84] sm:$0xff]
        %v290 = vld [vmem:[#allocation6 + $0x8c] sm:$0xf]
        %v291 = vld [vmem:[#allocation6 + $0x90] sm:$0xff]
        %v292 = vld [vmem:[#allocation6 + $0x98] sm:$0xf]
        %v293 = vld [vmem:[#allocation6 + $0x9c] sm:$0xff]
        %v294 = vld [vmem:[#allocation6 + $0xa4] sm:$0xf]
        %v295 = vld [vmem:[#allocation6 + $0xa8] sm:$0xff]
        %v296 = vld [vmem:[#allocation6 + $0xb0] sm:$0xf]
        %v297 = vld [vmem:[#allocation6 + $0xb4] sm:$0xff]
        %v298 = vld [vmem:[#allocation6 + $0xbc] sm:$0xf]
        %v315 = vunpack.c.l.b16 %v251
        %v316 = vunpack.c.l.b16 %v252
        %v317 = vunpack.c.l.b16 %v253
        %v318 = vunpack.c.l.b16 %v254
        %v319 = vunpack.c.l.b16 %v255
        %v320 = vunpack.c.l.b16 %v256
        %v321 = vunpack.c.l.b16 %v257
        %v322 = vunpack.c.l.b16 %v258
        %v323 = vunpack.c.l.b16 %v259
        %v324 = vunpack.c.l.b16 %v260
        %v325 = vunpack.c.l.b16 %v261
        %v326 = vunpack.c.l.b16 %v262
        %v327 = vunpack.c.l.b16 %v263
        %v328 = vunpack.c.l.b16 %v264
        %v329 = vunpack.c.l.b16 %v265
        %v330 = vunpack.c.l.b16 %v266
        %v331 = vpack.c.b16 %v316, %v315
        %v332 = vpack.c.b16 %v318, %v317
        %v333 = vpack.c.b16 %v320, %v319
        %v334 = vpack.c.b16 %v322, %v321
        %v335 = vpack.c.b16 %v324, %v323
        %v336 = vpack.c.b16 %v326, %v325
        %v337 = vpack.c.b16 %v328, %v327
        %v338 = vpack.c.b16 %v330, %v329
        %v379 = vunpack.c.l.b16 %v267
        %v380 = vunpack.c.h.b16 %v267
        %v381 = vunpack.c.l.b16 %v268
        %v382 = vunpack.c.l.b16 %v269
        %v383 = vunpack.c.h.b16 %v269
        %v384 = vunpack.c.l.b16 %v270
        %v385 = vunpack.c.l.b16 %v271
        %v386 = vunpack.c.h.b16 %v271
        %v387 = vunpack.c.l.b16 %v272
        %v388 = vunpack.c.l.b16 %v273
        %v389 = vunpack.c.h.b16 %v273
        %v390 = vunpack.c.l.b16 %v274
        %v391 = vunpack.c.l.b16 %v275
        %v392 = vunpack.c.h.b16 %v275
        %v393 = vunpack.c.l.b16 %v276
        %v394 = vunpack.c.l.b16 %v277
        %v395 = vunpack.c.h.b16 %v277
        %v396 = vunpack.c.l.b16 %v278
        %v397 = vunpack.c.l.b16 %v279
        %v398 = vunpack.c.h.b16 %v279
        %v399 = vunpack.c.l.b16 %v280
        %v400 = vunpack.c.l.b16 %v281
        %v401 = vunpack.c.h.b16 %v281
        %v402 = vunpack.c.l.b16 %v282
        %v403 = vunpack.c.l.b16 %v283
        %v404 = vunpack.c.h.b16 %v283
        %v405 = vunpack.c.l.b16 %v284
        %v406 = vunpack.c.l.b16 %v285
        %v407 = vunpack.c.h.b16 %v285
        %v408 = vunpack.c.l.b16 %v286
        %v409 = vunpack.c.l.b16 %v287
        %v410 = vunpack.c.h.b16 %v287
        %v411 = vunpack.c.l.b16 %v288
        %v412 = vunpack.c.l.b16 %v289
        %v413 = vunpack.c.h.b16 %v289
        %v414 = vunpack.c.l.b16 %v290
        %v415 = vunpack.c.l.b16 %v291
        %v416 = vunpack.c.h.b16 %v291
        %v417 = vunpack.c.l.b16 %v292
        %v418 = vunpack.c.l.b16 %v293
        %v419 = vunpack.c.h.b16 %v293
        %v420 = vunpack.c.l.b16 %v294
        %v421 = vunpack.c.l.b16 %v295
        %v422 = vunpack.c.h.b16 %v295
        %v423 = vunpack.c.l.b16 %v296
        %v424 = vunpack.c.l.b16 %v297
        %v425 = vunpack.c.h.b16 %v297
        %v426 = vunpack.c.l.b16 %v298
        %v427 = vpack.c.b16 %v382, %v379
        %v428 = vpack.c.b16 %v383, %v380
        %v429 = vpack.c.b16 %v384, %v381
        %v430 = vpack.c.b16 %v388, %v385
        %v431 = vpack.c.b16 %v389, %v386
        %v432 = vpack.c.b16 %v390, %v387
        %v433 = vpack.c.b16 %v394, %v391
        %v434 = vpack.c.b16 %v395, %v392
        %v435 = vpack.c.b16 %v396, %v393
        %v436 = vpack.c.b16 %v400, %v397
        %v437 = vpack.c.b16 %v401, %v398
        %v438 = vpack.c.b16 %v402, %v399
        %v439 = vpack.c.b16 %v406, %v403
        %v440 = vpack.c.b16 %v407, %v404
        %v441 = vpack.c.b16 %v408, %v405
        %v442 = vpack.c.b16 %v412, %v409
        %v443 = vpack.c.b16 %v413, %v410
        %v444 = vpack.c.b16 %v414, %v411
        %v445 = vpack.c.b16 %v418, %v415
        %v446 = vpack.c.b16 %v419, %v416
        %v447 = vpack.c.b16 %v420, %v417
        %v448 = vpack.c.b16 %v424, %v421
        %v449 = vpack.c.b16 %v425, %v422
        %v450 = vpack.c.b16 %v426, %v423
        %475 = vmatpush.bf16.msra.mxu0 %v448
        %476 = vmatpush.bf16.msra.mxu0 %v445
        %477 = vmatpush.bf16.msra.mxu0 %v442
        %478 = vmatpush.bf16.msra.mxu0 %v439
        %479 = vmatpush.bf16.msra.mxu0 %v436
        %480 = vmatpush.bf16.msra.mxu0 %v433
        %481 = vmatpush.bf16.msra.mxu0 %v430
        %482 = vmatpush.bf16.msra.mxu0 %v427
        %483 = vmatmul.bf16.gmra.mxu0 %v331
        %v484 = vpop.f32.mrf.mxu0
        %v485 = vadd.f32 0.0, %v484
        %v486 = vpop.f32.mrf.mxu0
        %v487 = vadd.f32 0.0, %v486
        %488 = vmatmul.bf16.gmra.mxu0 %v332
        %v489 = vpop.f32.mrf.mxu0
        %v490 = vadd.f32 0.0, %v489
        %v491 = vpop.f32.mrf.mxu0
        %v492 = vadd.f32 0.0, %v491
        %493 = vmatmul.bf16.gmra.mxu0 %v333
        %v494 = vpop.f32.mrf.mxu0
        %v495 = vadd.f32 0.0, %v494
        %v496 = vpop.f32.mrf.mxu0
        %v497 = vadd.f32 0.0, %v496
        %498 = vmatmul.bf16.gmra.mxu0 %v334
        %v499 = vpop.f32.mrf.mxu0
        %v500 = vadd.f32 0.0, %v499
        %v501 = vpop.f32.mrf.mxu0
        %v502 = vadd.f32 0.0, %v501
        %503 = vmatmul.bf16.gmra.mxu0 %v335
        %v504 = vpop.f32.mrf.mxu0
        %v505 = vadd.f32 0.0, %v504
        %v506 = vpop.f32.mrf.mxu0
        %v507 = vadd.f32 0.0, %v506
        %508 = vmatmul.bf16.gmra.mxu0 %v336
        %v509 = vpop.f32.mrf.mxu0
        %v510 = vadd.f32 0.0, %v509
        %v511 = vpop.f32.mrf.mxu0
        %v512 = vadd.f32 0.0, %v511
        %513 = vmatmul.bf16.gmra.mxu0 %v337
        %v514 = vpop.f32.mrf.mxu0
        %v515 = vadd.f32 0.0, %v514
        %v516 = vpop.f32.mrf.mxu0
        %v517 = vadd.f32 0.0, %v516
        %518 = vmatmul.bf16.gmra.mxu0 %v338
        %v519 = vpop.f32.mrf.mxu0
        %v520 = vadd.f32 0.0, %v519
        %v521 = vpop.f32.mrf.mxu0
        %v522 = vadd.f32 0.0, %v521
        %523 = vdwg.mxu0
        %524 = vmatpush.bf16.msra.mxu0 %v449
        %525 = vmatpush.bf16.msra.mxu0 %v446
        %526 = vmatpush.bf16.msra.mxu0 %v443
        %527 = vmatpush.bf16.msra.mxu0 %v440
        %528 = vmatpush.bf16.msra.mxu0 %v437
        %529 = vmatpush.bf16.msra.mxu0 %v434
        %530 = vmatpush.bf16.msra.mxu0 %v431
        %531 = vmatpush.bf16.msra.mxu0 %v428
        %532 = vmatmul.bf16.gmra.mxu0 %v331
        %v533 = vpop.f32.mrf.mxu0
        %v534 = vadd.f32 0.0, %v533
        %v535 = vpop.f32.mrf.mxu0
        %v536 = vadd.f32 0.0, %v535
        %537 = vmatmul.bf16.gmra.mxu0 %v332
        %v538 = vpop.f32.mrf.mxu0
        %v539 = vadd.f32 0.0, %v538
        %v540 = vpop.f32.mrf.mxu0
        %v541 = vadd.f32 0.0, %v540
        %542 = vmatmul.bf16.gmra.mxu0 %v333
        %v543 = vpop.f32.mrf.mxu0
        %v544 = vadd.f32 0.0, %v543
        %v545 = vpop.f32.mrf.mxu0
        %v546 = vadd.f32 0.0, %v545
        %547 = vmatmul.bf16.gmra.mxu0 %v334
        %v548 = vpop.f32.mrf.mxu0
        %v549 = vadd.f32 0.0, %v548
        %v550 = vpop.f32.mrf.mxu0
        %v551 = vadd.f32 0.0, %v550
        %552 = vmatmul.bf16.gmra.mxu0 %v335
        %v553 = vpop.f32.mrf.mxu0
        %v554 = vadd.f32 0.0, %v553
        %v555 = vpop.f32.mrf.mxu0
        %v556 = vadd.f32 0.0, %v555
        %557 = vmatmul.bf16.gmra.mxu0 %v336
        %v558 = vpop.f32.mrf.mxu0
        %v559 = vadd.f32 0.0, %v558
        %v560 = vpop.f32.mrf.mxu0
        %v561 = vadd.f32 0.0, %v560
        %562 = vmatmul.bf16.gmra.mxu0 %v337
        %v563 = vpop.f32.mrf.mxu0
        %v564 = vadd.f32 0.0, %v563
        %v565 = vpop.f32.mrf.mxu0
        %v566 = vadd.f32 0.0, %v565
        %567 = vmatmul.bf16.gmra.mxu0 %v338
        %v568 = vpop.f32.mrf.mxu0
        %v569 = vadd.f32 0.0, %v568
        %v570 = vpop.f32.mrf.mxu0
        %v571 = vadd.f32 0.0, %v570
        %572 = vdwg.mxu0
        %573 = vmatpush.bf16.msra.mxu0 %v450
        %574 = vmatpush.bf16.msra.mxu0 %v447
        %575 = vmatpush.bf16.msra.mxu0 %v444
        %576 = vmatpush.bf16.msra.mxu0 %v441
        %577 = vmatpush.bf16.msra.mxu0 %v438
        %578 = vmatpush.bf16.msra.mxu0 %v435
        %579 = vmatpush.bf16.msra.mxu0 %v432
        %580 = vmatpush.bf16.msra.mxu0 %v429
        %581 = vmatmul.bf16.gmra.mxu0 %v331
        %v582 = vpop.f32.mrf.mxu0
        %v583 = vadd.f32 0.0, %v582
        %v584 = vpop.f32.mrf.mxu0
        %v585 = vadd.f32 0.0, %v584
        %586 = vmatmul.bf16.gmra.mxu0 %v332
        %v587 = vpop.f32.mrf.mxu0
        %v588 = vadd.f32 0.0, %v587
        %v589 = vpop.f32.mrf.mxu0
        %v590 = vadd.f32 0.0, %v589
        %591 = vmatmul.bf16.gmra.mxu0 %v333
        %v592 = vpop.f32.mrf.mxu0
        %v593 = vadd.f32 0.0, %v592
        %v594 = vpop.f32.mrf.mxu0
        %v595 = vadd.f32 0.0, %v594
        %596 = vmatmul.bf16.gmra.mxu0 %v334
        %v597 = vpop.f32.mrf.mxu0
        %v598 = vadd.f32 0.0, %v597
        %v599 = vpop.f32.mrf.mxu0
        %v600 = vadd.f32 0.0, %v599
        %601 = vmatmul.bf16.gmra.mxu0 %v335
        %v602 = vpop.f32.mrf.mxu0
        %v603 = vadd.f32 0.0, %v602
        %v604 = vpop.f32.mrf.mxu0
        %v605 = vadd.f32 0.0, %v604
        %606 = vmatmul.bf16.gmra.mxu0 %v336
        %v607 = vpop.f32.mrf.mxu0
        %v608 = vadd.f32 0.0, %v607
        %v609 = vpop.f32.mrf.mxu0
        %v610 = vadd.f32 0.0, %v609
        %611 = vmatmul.bf16.gmra.mxu0 %v337
        %v612 = vpop.f32.mrf.mxu0
        %v613 = vadd.f32 0.0, %v612
        %v614 = vpop.f32.mrf.mxu0
        %v615 = vadd.f32 0.0, %v614
        %616 = vmatmul.bf16.gmra.mxu0 %v338
        %v617 = vpop.f32.mrf.mxu0
        %v618 = vadd.f32 0.0, %v617
        %v619 = vpop.f32.mrf.mxu0
        %v620 = vadd.f32 0.0, %v619
        %621 = vdwg.mxu0
        %v622 = vpack.c.bf16 %v534, %v485
        %v623 = vpack.c.bf16 %v583, %v583
        %v624 = vpack.c.bf16 %v536, %v487
        %v625 = vpack.c.bf16 %v585, %v585
        %v626 = vpack.c.bf16 %v539, %v490
        %v627 = vpack.c.bf16 %v588, %v588
        %v628 = vpack.c.bf16 %v541, %v492
        %v629 = vpack.c.bf16 %v590, %v590
        %v630 = vpack.c.bf16 %v544, %v495
        %v631 = vpack.c.bf16 %v593, %v593
        %v632 = vpack.c.bf16 %v546, %v497
        %v633 = vpack.c.bf16 %v595, %v595
        %v634 = vpack.c.bf16 %v549, %v500
        %v635 = vpack.c.bf16 %v598, %v598
        %v636 = vpack.c.bf16 %v551, %v502
        %v637 = vpack.c.bf16 %v600, %v600
        %v638 = vpack.c.bf16 %v554, %v505
        %v639 = vpack.c.bf16 %v603, %v603
        %v640 = vpack.c.bf16 %v556, %v507
        %v641 = vpack.c.bf16 %v605, %v605
        %v642 = vpack.c.bf16 %v559, %v510
        %v643 = vpack.c.bf16 %v608, %v608
        %v644 = vpack.c.bf16 %v561, %v512
        %v645 = vpack.c.bf16 %v610, %v610
        %v646 = vpack.c.bf16 %v564, %v515
        %v647 = vpack.c.bf16 %v613, %v613
        %v648 = vpack.c.bf16 %v566, %v517
        %v649 = vpack.c.bf16 %v615, %v615
        %v650 = vpack.c.bf16 %v569, %v520
        %v651 = vpack.c.bf16 %v618, %v618
        %v652 = vpack.c.bf16 %v571, %v522
        %v653 = vpack.c.bf16 %v620, %v620
        %v654 = vlaneseq
        %v655 = vand.u32 %v654, 127
        %vm656 = vcmp.lt.s32.totalorder %v655, 100
        %v673 = vunpack.c.l.b16 %v622
        %v674 = vunpack.c.l.b16 %v624
        %v675 = vunpack.c.l.b16 %v626
        %v676 = vunpack.c.l.b16 %v628
        %v677 = vunpack.c.l.b16 %v630
        %v678 = vunpack.c.l.b16 %v632
        %v679 = vunpack.c.l.b16 %v634
        %v680 = vunpack.c.l.b16 %v636
        %v681 = vunpack.c.l.b16 %v638
        %v682 = vunpack.c.l.b16 %v640
        %v683 = vunpack.c.l.b16 %v642
        %v684 = vunpack.c.l.b16 %v644
        %v685 = vunpack.c.l.b16 %v646
        %v686 = vunpack.c.l.b16 %v648
        %v687 = vunpack.c.l.b16 %v650
        %v688 = vunpack.c.l.b16 %v652
        %v689 = vpack.c.b16 %v674, %v673
        %v690 = vpack.c.b16 %v676, %v675
        %v691 = vpack.c.b16 %v678, %v677
        %v692 = vpack.c.b16 %v680, %v679
        %v693 = vpack.c.b16 %v682, %v681
        %v694 = vpack.c.b16 %v684, %v683
        %v695 = vpack.c.b16 %v686, %v685
        %v696 = vpack.c.b16 %v688, %v687
        %v697 = vunpack.c.h.b16 %v622
        %v698 = vunpack.c.h.b16 %v624
        %v699 = vunpack.c.h.b16 %v626
        %v700 = vunpack.c.h.b16 %v628
        %v701 = vunpack.c.h.b16 %v630
        %v702 = vunpack.c.h.b16 %v632
        %v703 = vunpack.c.h.b16 %v634
        %v704 = vunpack.c.h.b16 %v636
        %v705 = vunpack.c.h.b16 %v638
        %v706 = vunpack.c.h.b16 %v640
        %v707 = vunpack.c.h.b16 %v642
        %v708 = vunpack.c.h.b16 %v644
        %v709 = vunpack.c.h.b16 %v646
        %v710 = vunpack.c.h.b16 %v648
        %v711 = vunpack.c.h.b16 %v650
        %v712 = vunpack.c.h.b16 %v652
        %v713 = vpack.c.b16 %v698, %v697
        %v714 = vpack.c.b16 %v700, %v699
        %v715 = vpack.c.b16 %v702, %v701
        %v716 = vpack.c.b16 %v704, %v703
        %v717 = vpack.c.b16 %v706, %v705
        %v718 = vpack.c.b16 %v708, %v707
        %v719 = vpack.c.b16 %v710, %v709
        %v720 = vpack.c.b16 %v712, %v711
        %vm721 = vcmask 523264
        %v723 = vsel %vm721, %v689, 0
        %v726 = vsel %vm721, %v690, 0
        %v729 = vsel %vm721, %v691, 0
        %v732 = vsel %vm721, %v692, 0
        %v735 = vsel %vm721, %v693, 0
        %v738 = vsel %vm721, %v694, 0
        %v741 = vsel %vm721, %v695, 0
        %v744 = vsel %vm721, %v696, 0
        %v747 = vsel %vm721, %v713, 0
        %v750 = vsel %vm721, %v714, 0
        %v753 = vsel %vm721, %v715, 0
        %v756 = vsel %vm721, %v716, 0
        %v759 = vsel %vm721, %v717, 0
        %v762 = vsel %vm721, %v718, 0
        %v765 = vsel %vm721, %v719, 0
        %v768 = vsel %vm721, %v720, 0
        %770 = vmatpush.bf16.xpose.msra.mxu0 %v768
        %771 = vmatpush.bf16.xpose.msra.mxu0 %v765
        %772 = vmatpush.bf16.xpose.msra.mxu0 %v762
        %773 = vmatpush.bf16.xpose.msra.mxu0 %v759
        %774 = vmatpush.bf16.xpose.msra.mxu0 %v756
        %775 = vmatpush.bf16.xpose.msra.mxu0 %v753
        %776 = vmatpush.bf16.xpose.msra.mxu0 %v750
        %777 = vmatpush.bf16.xpose.msra.mxu0 %v747
        %778 = vmatmul.bf16.gmra.mxu0 %v723
        %v779 = vpop.f32.mrf.mxu0
        %v780 = vadd.f32 0.0, %v779
        %v781 = vpop.f32.mrf.mxu0
        %v782 = vadd.f32 0.0, %v781
        %783 = vmatmul.bf16.gmra.mxu0 %v726
        %v784 = vpop.f32.mrf.mxu0
        %v785 = vadd.f32 0.0, %v784
        %v786 = vpop.f32.mrf.mxu0
        %v787 = vadd.f32 0.0, %v786
        %788 = vmatmul.bf16.gmra.mxu0 %v729
        %v789 = vpop.f32.mrf.mxu0
        %v790 = vadd.f32 0.0, %v789
        %v791 = vpop.f32.mrf.mxu0
        %v792 = vadd.f32 0.0, %v791
        %793 = vmatmul.bf16.gmra.mxu0 %v732
        %v794 = vpop.f32.mrf.mxu0
        %v795 = vadd.f32 0.0, %v794
        %v796 = vpop.f32.mrf.mxu0
        %v797 = vadd.f32 0.0, %v796
        %798 = vmatmul.bf16.gmra.mxu0 %v735
        %v799 = vpop.f32.mrf.mxu0
        %v800 = vadd.f32 0.0, %v799
        %v801 = vpop.f32.mrf.mxu0
        %v802 = vadd.f32 0.0, %v801
        %803 = vmatmul.bf16.gmra.mxu0 %v738
        %v804 = vpop.f32.mrf.mxu0
        %v805 = vadd.f32 0.0, %v804
        %v806 = vpop.f32.mrf.mxu0
        %v807 = vadd.f32 0.0, %v806
        %808 = vmatmul.bf16.gmra.mxu0 %v741
        %v809 = vpop.f32.mrf.mxu0
        %v810 = vadd.f32 0.0, %v809
        %v811 = vpop.f32.mrf.mxu0
        %v812 = vadd.f32 0.0, %v811
        %813 = vmatmul.bf16.gmra.mxu0 %v744
        %v814 = vpop.f32.mrf.mxu0
        %v815 = vadd.f32 0.0, %v814
        %v816 = vpop.f32.mrf.mxu0
        %v817 = vadd.f32 0.0, %v816
        %818 = vdwg.mxu0
        %v819 = vsel %vm656, 1, 0
        %vm820 = vcmp.eq.s32.totalorder %v819, 1
        %v821 = vsel %vm820, %v780, -1e+30
        %v822 = vsel %vm820, %v782, -1e+30
        %v823 = vsel %vm820, %v785, -1e+30
        %v824 = vsel %vm820, %v787, -1e+30
        %v825 = vsel %vm820, %v790, -1e+30
        %v826 = vsel %vm820, %v792, -1e+30
        %v827 = vsel %vm820, %v795, -1e+30
        %v828 = vsel %vm820, %v797, -1e+30
        %v829 = vsel %vm820, %v800, -1e+30
        %v830 = vsel %vm820, %v802, -1e+30
        %v831 = vsel %vm820, %v805, -1e+30
        %v832 = vsel %vm820, %v807, -1e+30
        %v833 = vsel %vm820, %v810, -1e+30
        %v834 = vsel %vm820, %v812, -1e+30
        %v835 = vsel %vm820, %v815, -1e+30
        %v836 = vsel %vm820, %v817, -1e+30
        %837 = vmax.xlane.f32.xlu0 %v821
        %v838 = vpop.xlane.xlu0 %837
        %839 = vmax.xlane.f32.xlu0 %v822
        %v840 = vpop.xlane.xlu0 %839
        %841 = vmax.xlane.f32.xlu0 %v823
        %v842 = vpop.xlane.xlu0 %841
        %843 = vmax.xlane.f32.xlu0 %v824
        %v844 = vpop.xlane.xlu0 %843
        %845 = vmax.xlane.f32.xlu0 %v825
        %v846 = vpop.xlane.xlu0 %845
        %847 = vmax.xlane.f32.xlu0 %v826
        %v848 = vpop.xlane.xlu0 %847
        %849 = vmax.xlane.f32.xlu0 %v827
        %v850 = vpop.xlane.xlu0 %849
        %851 = vmax.xlane.f32.xlu0 %v828
        %v852 = vpop.xlane.xlu0 %851
        %853 = vmax.xlane.f32.xlu0 %v829
        %v854 = vpop.xlane.xlu0 %853
        %855 = vmax.xlane.f32.xlu0 %v830
        %v856 = vpop.xlane.xlu0 %855
        %857 = vmax.xlane.f32.xlu0 %v831
        %v858 = vpop.xlane.xlu0 %857
        %859 = vmax.xlane.f32.xlu0 %v832
        %v860 = vpop.xlane.xlu0 %859
        %861 = vmax.xlane.f32.xlu0 %v833
        %v862 = vpop.xlane.xlu0 %861
        %863 = vmax.xlane.f32.xlu0 %v834
        %v864 = vpop.xlane.xlu0 %863
        %865 = vmax.xlane.f32.xlu0 %v835
        %v866 = vpop.xlane.xlu0 %865
        %867 = vmax.xlane.f32.xlu0 %v836
        %v868 = vpop.xlane.xlu0 %867
        %v869 = vsub.f32 %v821, %v838
        %v870 = vsub.f32 %v822, %v840
        %v871 = vsub.f32 %v823, %v842
        %v872 = vsub.f32 %v824, %v844
        %v873 = vsub.f32 %v825, %v846
        %v874 = vsub.f32 %v826, %v848
        %v875 = vsub.f32 %v827, %v850
        %v876 = vsub.f32 %v828, %v852
        %v877 = vsub.f32 %v829, %v854
        %v878 = vsub.f32 %v830, %v856
        %v879 = vsub.f32 %v831, %v858
        %v880 = vsub.f32 %v832, %v860
        %v881 = vsub.f32 %v833, %v862
        %v882 = vsub.f32 %v834, %v864
        %v883 = vsub.f32 %v835, %v866
        %v884 = vsub.f32 %v836, %v868
        %v885 = vmul.f32 %v869, 1.442695
        %v886 = vpow.pop %v885
        %v887 = vmul.f32 %v870, 1.442695
        %v888 = vpow.pop %v887
        %v889 = vmul.f32 %v871, 1.442695
        %v890 = vpow.pop %v889
        %v891 = vmul.f32 %v872, 1.442695
        %v892 = vpow.pop %v891
        %v893 = vmul.f32 %v873, 1.442695
        %v894 = vpow.pop %v893
        %v895 = vmul.f32 %v874, 1.442695
        %v896 = vpow.pop %v895
        %v897 = vmul.f32 %v875, 1.442695
        %v898 = vpow.pop %v897
        %v899 = vmul.f32 %v876, 1.442695
        %v900 = vpow.pop %v899
        %v901 = vmul.f32 %v877, 1.442695
        %v902 = vpow.pop %v901
        %v903 = vmul.f32 %v878, 1.442695
        %v904 = vpow.pop %v903
        %v905 = vmul.f32 %v879, 1.442695
        %v906 = vpow.pop %v905
        %v907 = vmul.f32 %v880, 1.442695
        %v908 = vpow.pop %v907
        %v909 = vmul.f32 %v881, 1.442695
        %v910 = vpow.pop %v909
        %v911 = vmul.f32 %v882, 1.442695
        %v912 = vpow.pop %v911
        %v913 = vmul.f32 %v883, 1.442695
        %v914 = vpow.pop %v913
        %v915 = vmul.f32 %v884, 1.442695
        %v916 = vpow.pop %v915
        %917 = vadd.xlane.f32.xlu0 %v886
        %v918 = vpop.xlane.xlu0 %917
        %919 = vadd.xlane.f32.xlu0 %v888
        %v920 = vpop.xlane.xlu0 %919
        %921 = vadd.xlane.f32.xlu0 %v890
        %v922 = vpop.xlane.xlu0 %921
        %923 = vadd.xlane.f32.xlu0 %v892
        %v924 = vpop.xlane.xlu0 %923
        %925 = vadd.xlane.f32.xlu0 %v894
        %v926 = vpop.xlane.xlu0 %925
        %927 = vadd.xlane.f32.xlu0 %v896
        %v928 = vpop.xlane.xlu0 %927
        %929 = vadd.xlane.f32.xlu0 %v898
        %v930 = vpop.xlane.xlu0 %929
        %931 = vadd.xlane.f32.xlu0 %v900
        %v932 = vpop.xlane.xlu0 %931
        %933 = vadd.xlane.f32.xlu0 %v902
        %v934 = vpop.xlane.xlu0 %933
        %935 = vadd.xlane.f32.xlu0 %v904
        %v936 = vpop.xlane.xlu0 %935
        %937 = vadd.xlane.f32.xlu0 %v906
        %v938 = vpop.xlane.xlu0 %937
        %939 = vadd.xlane.f32.xlu0 %v908
        %v940 = vpop.xlane.xlu0 %939
        %941 = vadd.xlane.f32.xlu0 %v910
        %v942 = vpop.xlane.xlu0 %941
        %943 = vadd.xlane.f32.xlu0 %v912
        %v944 = vpop.xlane.xlu0 %943
        %945 = vadd.xlane.f32.xlu0 %v914
        %v946 = vpop.xlane.xlu0 %945
        %947 = vadd.xlane.f32.xlu0 %v916
        %v948 = vpop.xlane.xlu0 %947
        %v949 = vpack.c.bf16 %v888, %v886
        %v950 = vpack.c.bf16 %v892, %v890
        %v951 = vpack.c.bf16 %v896, %v894
        %v952 = vpack.c.bf16 %v900, %v898
        %v953 = vpack.c.bf16 %v904, %v902
        %v954 = vpack.c.bf16 %v908, %v906
        %v955 = vpack.c.bf16 %v912, %v910
        %v956 = vpack.c.bf16 %v916, %v914
        %v973 = vunpack.c.l.b16 %v623
        %v974 = vunpack.c.l.b16 %v625
        %v975 = vunpack.c.l.b16 %v627
        %v976 = vunpack.c.l.b16 %v629
        %v977 = vunpack.c.l.b16 %v631
        %v978 = vunpack.c.l.b16 %v633
        %v979 = vunpack.c.l.b16 %v635
        %v980 = vunpack.c.l.b16 %v637
        %v981 = vunpack.c.l.b16 %v639
        %v982 = vunpack.c.l.b16 %v641
        %v983 = vunpack.c.l.b16 %v643
        %v984 = vunpack.c.l.b16 %v645
        %v985 = vunpack.c.l.b16 %v647
        %v986 = vunpack.c.l.b16 %v649
        %v987 = vunpack.c.l.b16 %v651
        %v988 = vunpack.c.l.b16 %v653
        %v989 = vpack.c.b16 %v974, %v973
        %v990 = vpack.c.b16 %v976, %v975
        %v991 = vpack.c.b16 %v978, %v977
        %v992 = vpack.c.b16 %v980, %v979
        %v993 = vpack.c.b16 %v982, %v981
        %v994 = vpack.c.b16 %v984, %v983
        %v995 = vpack.c.b16 %v986, %v985
        %v996 = vpack.c.b16 %v988, %v987
        %1005 = vmatpush.bf16.msra.mxu0 %v996
        %1006 = vmatpush.bf16.msra.mxu0 %v995
        %1007 = vmatpush.bf16.msra.mxu0 %v994
        %1008 = vmatpush.bf16.msra.mxu0 %v993
        %1009 = vmatpush.bf16.msra.mxu0 %v992
        %1010 = vmatpush.bf16.msra.mxu0 %v991
        %1011 = vmatpush.bf16.msra.mxu0 %v990
        %1012 = vmatpush.bf16.msra.mxu0 %v989
        %1013 = vmatmul.bf16.gmra.mxu0 %v949
        %v1014 = vpop.f32.mrf.mxu0
        %v1015 = vadd.f32 0.0, %v1014
        %v1016 = vpop.f32.mrf.mxu0
        %v1017 = vadd.f32 0.0, %v1016
        %1018 = vmatmul.bf16.gmra.mxu0 %v950
        %v1019 = vpop.f32.mrf.mxu0
        %v1020 = vadd.f32 0.0, %v1019
        %v1021 = vpop.f32.mrf.mxu0
        %v1022 = vadd.f32 0.0, %v1021
        %1023 = vmatmul.bf16.gmra.mxu0 %v951
        %v1024 = vpop.f32.mrf.mxu0
        %v1025 = vadd.f32 0.0, %v1024
        %v1026 = vpop.f32.mrf.mxu0
        %v1027 = vadd.f32 0.0, %v1026
        %1028 = vmatmul.bf16.gmra.mxu0 %v952
        %v1029 = vpop.f32.mrf.mxu0
        %v1030 = vadd.f32 0.0, %v1029
        %v1031 = vpop.f32.mrf.mxu0
        %v1032 = vadd.f32 0.0, %v1031
        %1033 = vmatmul.bf16.gmra.mxu0 %v953
        %v1034 = vpop.f32.mrf.mxu0
        %v1035 = vadd.f32 0.0, %v1034
        %v1036 = vpop.f32.mrf.mxu0
        %v1037 = vadd.f32 0.0, %v1036
        %1038 = vmatmul.bf16.gmra.mxu0 %v954
        %v1039 = vpop.f32.mrf.mxu0
        %v1040 = vadd.f32 0.0, %v1039
        %v1041 = vpop.f32.mrf.mxu0
        %v1042 = vadd.f32 0.0, %v1041
        %1043 = vmatmul.bf16.gmra.mxu0 %v955
        %v1044 = vpop.f32.mrf.mxu0
        %v1045 = vadd.f32 0.0, %v1044
        %v1046 = vpop.f32.mrf.mxu0
        %v1047 = vadd.f32 0.0, %v1046
        %1048 = vmatmul.bf16.gmra.mxu0 %v956
        %v1049 = vpop.f32.mrf.mxu0
        %v1050 = vadd.f32 0.0, %v1049
        %v1051 = vpop.f32.mrf.mxu0
        %v1052 = vadd.f32 0.0, %v1051
        %1053 = vdwg.mxu0
        %v1054 = vrcp.pop %v918
        %v1055 = vrcp.pop %v920
        %v1056 = vrcp.pop %v922
        %v1057 = vrcp.pop %v924
        %v1058 = vrcp.pop %v926
        %v1059 = vrcp.pop %v928
        %v1060 = vrcp.pop %v930
        %v1061 = vrcp.pop %v932
        %v1062 = vrcp.pop %v934
        %v1063 = vrcp.pop %v936
        %v1064 = vrcp.pop %v938
        %v1065 = vrcp.pop %v940
        %v1066 = vrcp.pop %v942
        %v1067 = vrcp.pop %v944
        %v1068 = vrcp.pop %v946
        %v1069 = vrcp.pop %v948
        %v1070 = vmul.f32 %v1015, %v1054
        %v1071 = vmul.f32 %v1017, %v1055
        %v1072 = vmul.f32 %v1020, %v1056
        %v1073 = vmul.f32 %v1022, %v1057
        %v1074 = vmul.f32 %v1025, %v1058
        %v1075 = vmul.f32 %v1027, %v1059
        %v1076 = vmul.f32 %v1030, %v1060
        %v1077 = vmul.f32 %v1032, %v1061
        %v1078 = vmul.f32 %v1035, %v1062
        %v1079 = vmul.f32 %v1037, %v1063
        %v1080 = vmul.f32 %v1040, %v1064
        %v1081 = vmul.f32 %v1042, %v1065
        %v1082 = vmul.f32 %v1045, %v1066
        %v1083 = vmul.f32 %v1047, %v1067
        %v1084 = vmul.f32 %v1050, %v1068
        %v1085 = vmul.f32 %v1052, %v1069
        %v1086 = vpack.c.bf16 %v1070, %v1070
        %v1087 = vpack.c.bf16 %v1071, %v1071
        %v1088 = vpack.c.bf16 %v1072, %v1072
        %v1089 = vpack.c.bf16 %v1073, %v1073
        %v1090 = vpack.c.bf16 %v1074, %v1074
        %v1091 = vpack.c.bf16 %v1075, %v1075
        %v1092 = vpack.c.bf16 %v1076, %v1076
        %v1093 = vpack.c.bf16 %v1077, %v1077
        %v1094 = vpack.c.bf16 %v1078, %v1078
        %v1095 = vpack.c.bf16 %v1079, %v1079
        %v1096 = vpack.c.bf16 %v1080, %v1080
        %v1097 = vpack.c.bf16 %v1081, %v1081
        %v1098 = vpack.c.bf16 %v1082, %v1082
        %v1099 = vpack.c.bf16 %v1083, %v1083
        %v1100 = vpack.c.bf16 %v1084, %v1084
        %v1101 = vpack.c.bf16 %v1085, %v1085
        %vm1102 = vcmask 519168
        %1103 = vst.msk [vmem:[#allocation2] sm:$0xf] %vm1102, %v1086
        %1104 = vst.msk [vmem:[#allocation2 + $0x4] sm:$0xf] %vm1102, %v1087
        %1105 = vst.msk [vmem:[#allocation2 + $0x8] sm:$0xf] %vm1102, %v1088
        %1106 = vst.msk [vmem:[#allocation2 + $0xc] sm:$0xf] %vm1102, %v1089
        %1107 = vst.msk [vmem:[#allocation2 + $0x10] sm:$0xf] %vm1102, %v1090
        %1108 = vst.msk [vmem:[#allocation2 + $0x14] sm:$0xf] %vm1102, %v1091
        %1109 = vst.msk [vmem:[#allocation2 + $0x18] sm:$0xf] %vm1102, %v1092
        %1110 = vst.msk [vmem:[#allocation2 + $0x1c] sm:$0xf] %vm1102, %v1093
        %1111 = vst.msk [vmem:[#allocation2 + $0x20] sm:$0xf] %vm1102, %v1094
        %1112 = vst.msk [vmem:[#allocation2 + $0x24] sm:$0xf] %vm1102, %v1095
        %1113 = vst.msk [vmem:[#allocation2 + $0x28] sm:$0xf] %vm1102, %v1096
        %1114 = vst.msk [vmem:[#allocation2 + $0x2c] sm:$0xf] %vm1102, %v1097
        %1115 = vst.msk [vmem:[#allocation2 + $0x30] sm:$0xf] %vm1102, %v1098
        %1116 = vst.msk [vmem:[#allocation2 + $0x34] sm:$0xf] %vm1102, %v1099
        %1117 = vst.msk [vmem:[#allocation2 + $0x38] sm:$0xf] %vm1102, %v1100
        %1118 = vst.msk [vmem:[#allocation2 + $0x3c] sm:$0xf] %vm1102, %v1101
        %1119 = vrot.lane.b32.xlu0 %v689, 64
        %v1120 = vpop.permute.xlu0 %1119
        %1121 = vrot.lane.b32.xlu0 %v690, 64
        %v1122 = vpop.permute.xlu0 %1121
        %1123 = vrot.lane.b32.xlu0 %v691, 64
        %v1124 = vpop.permute.xlu0 %1123
        %1125 = vrot.lane.b32.xlu0 %v692, 64
        %v1126 = vpop.permute.xlu0 %1125
        %1127 = vrot.lane.b32.xlu0 %v693, 64
        %v1128 = vpop.permute.xlu0 %1127
        %1129 = vrot.lane.b32.xlu0 %v694, 64
        %v1130 = vpop.permute.xlu0 %1129
        %1131 = vrot.lane.b32.xlu0 %v695, 64
        %v1132 = vpop.permute.xlu0 %1131
        %1133 = vrot.lane.b32.xlu0 %v696, 64
        %v1134 = vpop.permute.xlu0 %1133
        %1135 = vrot.lane.b32.xlu0 %v713, 64
        %v1136 = vpop.permute.xlu0 %1135
        %1137 = vrot.lane.b32.xlu0 %v714, 64
        %v1138 = vpop.permute.xlu0 %1137
        %1139 = vrot.lane.b32.xlu0 %v715, 64
        %v1140 = vpop.permute.xlu0 %1139
        %1141 = vrot.lane.b32.xlu0 %v716, 64
        %v1142 = vpop.permute.xlu0 %1141
        %1143 = vrot.lane.b32.xlu0 %v717, 64
        %v1144 = vpop.permute.xlu0 %1143
        %1145 = vrot.lane.b32.xlu0 %v718, 64
        %v1146 = vpop.permute.xlu0 %1145
        %1147 = vrot.lane.b32.xlu0 %v719, 64
        %v1148 = vpop.permute.xlu0 %1147
        %1149 = vrot.lane.b32.xlu0 %v720, 64
        %v1150 = vpop.permute.xlu0 %1149
        %v1152 = vsel %vm721, %v1120, 0
        %v1155 = vsel %vm721, %v1122, 0
        %v1158 = vsel %vm721, %v1124, 0
        %v1161 = vsel %vm721, %v1126, 0
        %v1164 = vsel %vm721, %v1128, 0
        %v1167 = vsel %vm721, %v1130, 0
        %v1170 = vsel %vm721, %v1132, 0
        %v1173 = vsel %vm721, %v1134, 0
        %v1176 = vsel %vm721, %v1136, 0
        %v1179 = vsel %vm721, %v1138, 0
        %v1182 = vsel %vm721, %v1140, 0
        %v1185 = vsel %vm721, %v1142, 0
        %v1188 = vsel %vm721, %v1144, 0
        %v1191 = vsel %vm721, %v1146, 0
        %v1194 = vsel %vm721, %v1148, 0
        %v1197 = vsel %vm721, %v1150, 0
        %1199 = vmatpush.bf16.xpose.msra.mxu0 %v1197
        %1200 = vmatpush.bf16.xpose.msra.mxu0 %v1194
        %1201 = vmatpush.bf16.xpose.msra.mxu0 %v1191
        %1202 = vmatpush.bf16.xpose.msra.mxu0 %v1188
        %1203 = vmatpush.bf16.xpose.msra.mxu0 %v1185
        %1204 = vmatpush.bf16.xpose.msra.mxu0 %v1182
        %1205 = vmatpush.bf16.xpose.msra.mxu0 %v1179
        %1206 = vmatpush.bf16.xpose.msra.mxu0 %v1176
        %1207 = vmatmul.bf16.gmra.mxu0 %v1152
        %v1208 = vpop.f32.mrf.mxu0
        %v1209 = vadd.f32 0.0, %v1208
        %v1210 = vpop.f32.mrf.mxu0
        %v1211 = vadd.f32 0.0, %v1210
        %1212 = vmatmul.bf16.gmra.mxu0 %v1155
        %v1213 = vpop.f32.mrf.mxu0
        %v1214 = vadd.f32 0.0, %v1213
        %v1215 = vpop.f32.mrf.mxu0
        %v1216 = vadd.f32 0.0, %v1215
        %1217 = vmatmul.bf16.gmra.mxu0 %v1158
        %v1218 = vpop.f32.mrf.mxu0
        %v1219 = vadd.f32 0.0, %v1218
        %v1220 = vpop.f32.mrf.mxu0
        %v1221 = vadd.f32 0.0, %v1220
        %1222 = vmatmul.bf16.gmra.mxu0 %v1161
        %v1223 = vpop.f32.mrf.mxu0
        %v1224 = vadd.f32 0.0, %v1223
        %v1225 = vpop.f32.mrf.mxu0
        %v1226 = vadd.f32 0.0, %v1225
        %1227 = vmatmul.bf16.gmra.mxu0 %v1164
        %v1228 = vpop.f32.mrf.mxu0
        %v1229 = vadd.f32 0.0, %v1228
        %v1230 = vpop.f32.mrf.mxu0
        %v1231 = vadd.f32 0.0, %v1230
        %1232 = vmatmul.bf16.gmra.mxu0 %v1167
        %v1233 = vpop.f32.mrf.mxu0
        %v1234 = vadd.f32 0.0, %v1233
        %v1235 = vpop.f32.mrf.mxu0
        %v1236 = vadd.f32 0.0, %v1235
        %1237 = vmatmul.bf16.gmra.mxu0 %v1170
        %v1238 = vpop.f32.mrf.mxu0
        %v1239 = vadd.f32 0.0, %v1238
        %v1240 = vpop.f32.mrf.mxu0
        %v1241 = vadd.f32 0.0, %v1240
        %1242 = vmatmul.bf16.gmra.mxu0 %v1173
        %v1243 = vpop.f32.mrf.mxu0
        %v1244 = vadd.f32 0.0, %v1243
        %v1245 = vpop.f32.mrf.mxu0
        %v1246 = vadd.f32 0.0, %v1245
        %1247 = vdwg.mxu0
        %v1248 = vsel %vm820, %v1209, -1e+30
        %v1249 = vsel %vm820, %v1211, -1e+30
        %v1250 = vsel %vm820, %v1214, -1e+30
        %v1251 = vsel %vm820, %v1216, -1e+30
        %v1252 = vsel %vm820, %v1219, -1e+30
        %v1253 = vsel %vm820, %v1221, -1e+30
        %v1254 = vsel %vm820, %v1224, -1e+30
        %v1255 = vsel %vm820, %v1226, -1e+30
        %v1256 = vsel %vm820, %v1229, -1e+30
        %v1257 = vsel %vm820, %v1231, -1e+30
        %v1258 = vsel %vm820, %v1234, -1e+30
        %v1259 = vsel %vm820, %v1236, -1e+30
        %v1260 = vsel %vm820, %v1239, -1e+30
        %v1261 = vsel %vm820, %v1241, -1e+30
        %v1262 = vsel %vm820, %v1244, -1e+30
        %v1263 = vsel %vm820, %v1246, -1e+30
        %1264 = vmax.xlane.f32.xlu0 %v1248
        %v1265 = vpop.xlane.xlu0 %1264
        %1266 = vmax.xlane.f32.xlu0 %v1249
        %v1267 = vpop.xlane.xlu0 %1266
        %1268 = vmax.xlane.f32.xlu0 %v1250
        %v1269 = vpop.xlane.xlu0 %1268
        %1270 = vmax.xlane.f32.xlu0 %v1251
        %v1271 = vpop.xlane.xlu0 %1270
        %1272 = vmax.xlane.f32.xlu0 %v1252
        %v1273 = vpop.xlane.xlu0 %1272
        %1274 = vmax.xlane.f32.xlu0 %v1253
        %v1275 = vpop.xlane.xlu0 %1274
        %1276 = vmax.xlane.f32.xlu0 %v1254
        %v1277 = vpop.xlane.xlu0 %1276
        %1278 = vmax.xlane.f32.xlu0 %v1255
        %v1279 = vpop.xlane.xlu0 %1278
        %1280 = vmax.xlane.f32.xlu0 %v1256
        %v1281 = vpop.xlane.xlu0 %1280
        %1282 = vmax.xlane.f32.xlu0 %v1257
        %v1283 = vpop.xlane.xlu0 %1282
        %1284 = vmax.xlane.f32.xlu0 %v1258
        %v1285 = vpop.xlane.xlu0 %1284
        %1286 = vmax.xlane.f32.xlu0 %v1259
        %v1287 = vpop.xlane.xlu0 %1286
        %1288 = vmax.xlane.f32.xlu0 %v1260
        %v1289 = vpop.xlane.xlu0 %1288
        %1290 = vmax.xlane.f32.xlu0 %v1261
        %v1291 = vpop.xlane.xlu0 %1290
        %1292 = vmax.xlane.f32.xlu0 %v1262
        %v1293 = vpop.xlane.xlu0 %1292
        %1294 = vmax.xlane.f32.xlu0 %v1263
        %v1295 = vpop.xlane.xlu0 %1294
        %v1296 = vsub.f32 %v1248, %v1265
        %v1297 = vsub.f32 %v1249, %v1267
        %v1298 = vsub.f32 %v1250, %v1269
        %v1299 = vsub.f32 %v1251, %v1271
        %v1300 = vsub.f32 %v1252, %v1273
        %v1301 = vsub.f32 %v1253, %v1275
        %v1302 = vsub.f32 %v1254, %v1277
        %v1303 = vsub.f32 %v1255, %v1279
        %v1304 = vsub.f32 %v1256, %v1281
        %v1305 = vsub.f32 %v1257, %v1283
        %v1306 = vsub.f32 %v1258, %v1285
        %v1307 = vsub.f32 %v1259, %v1287
        %v1308 = vsub.f32 %v1260, %v1289
        %v1309 = vsub.f32 %v1261, %v1291
        %v1310 = vsub.f32 %v1262, %v1293
        %v1311 = vsub.f32 %v1263, %v1295
        %v1312 = vmul.f32 %v1296, 1.442695
        %v1313 = vpow.pop %v1312
        %v1314 = vmul.f32 %v1297, 1.442695
        %v1315 = vpow.pop %v1314
        %v1316 = vmul.f32 %v1298, 1.442695
        %v1317 = vpow.pop %v1316
        %v1318 = vmul.f32 %v1299, 1.442695
        %v1319 = vpow.pop %v1318
        %v1320 = vmul.f32 %v1300, 1.442695
        %v1321 = vpow.pop %v1320
        %v1322 = vmul.f32 %v1301, 1.442695
        %v1323 = vpow.pop %v1322
        %v1324 = vmul.f32 %v1302, 1.442695
        %v1325 = vpow.pop %v1324
        %v1326 = vmul.f32 %v1303, 1.442695
        %v1327 = vpow.pop %v1326
        %v1328 = vmul.f32 %v1304, 1.442695
        %v1329 = vpow.pop %v1328
        %v1330 = vmul.f32 %v1305, 1.442695
        %v1331 = vpow.pop %v1330
        %v1332 = vmul.f32 %v1306, 1.442695
        %v1333 = vpow.pop %v1332
        %v1334 = vmul.f32 %v1307, 1.442695
        %v1335 = vpow.pop %v1334
        %v1336 = vmul.f32 %v1308, 1.442695
        %v1337 = vpow.pop %v1336
        %v1338 = vmul.f32 %v1309, 1.442695
        %v1339 = vpow.pop %v1338
        %v1340 = vmul.f32 %v1310, 1.442695
        %v1341 = vpow.pop %v1340
        %v1342 = vmul.f32 %v1311, 1.442695
        %v1343 = vpow.pop %v1342
        %1344 = vadd.xlane.f32.xlu0 %v1313
        %v1345 = vpop.xlane.xlu0 %1344
        %1346 = vadd.xlane.f32.xlu0 %v1315
        %v1347 = vpop.xlane.xlu0 %1346
        %1348 = vadd.xlane.f32.xlu0 %v1317
        %v1349 = vpop.xlane.xlu0 %1348
        %1350 = vadd.xlane.f32.xlu0 %v1319
        %v1351 = vpop.xlane.xlu0 %1350
        %1352 = vadd.xlane.f32.xlu0 %v1321
        %v1353 = vpop.xlane.xlu0 %1352
        %1354 = vadd.xlane.f32.xlu0 %v1323
        %v1355 = vpop.xlane.xlu0 %1354
        %1356 = vadd.xlane.f32.xlu0 %v1325
        %v1357 = vpop.xlane.xlu0 %1356
        %1358 = vadd.xlane.f32.xlu0 %v1327
        %v1359 = vpop.xlane.xlu0 %1358
        %1360 = vadd.xlane.f32.xlu0 %v1329
        %v1361 = vpop.xlane.xlu0 %1360
        %1362 = vadd.xlane.f32.xlu0 %v1331
        %v1363 = vpop.xlane.xlu0 %1362
        %1364 = vadd.xlane.f32.xlu0 %v1333
        %v1365 = vpop.xlane.xlu0 %1364
        %1366 = vadd.xlane.f32.xlu0 %v1335
        %v1367 = vpop.xlane.xlu0 %1366
        %1368 = vadd.xlane.f32.xlu0 %v1337
        %v1369 = vpop.xlane.xlu0 %1368
        %1370 = vadd.xlane.f32.xlu0 %v1339
        %v1371 = vpop.xlane.xlu0 %1370
        %1372 = vadd.xlane.f32.xlu0 %v1341
        %v1373 = vpop.xlane.xlu0 %1372
        %1374 = vadd.xlane.f32.xlu0 %v1343
        %v1375 = vpop.xlane.xlu0 %1374
        %v1376 = vpack.c.bf16 %v1315, %v1313
        %v1377 = vpack.c.bf16 %v1319, %v1317
        %v1378 = vpack.c.bf16 %v1323, %v1321
        %v1379 = vpack.c.bf16 %v1327, %v1325
        %v1380 = vpack.c.bf16 %v1331, %v1329
        %v1381 = vpack.c.bf16 %v1335, %v1333
        %v1382 = vpack.c.bf16 %v1339, %v1337
        %v1383 = vpack.c.bf16 %v1343, %v1341
        %1384 = vrot.lane.b32.xlu0 %v989, 64
        %v1385 = vpop.permute.xlu0 %1384
        %1386 = vrot.lane.b32.xlu0 %v990, 64
        %v1387 = vpop.permute.xlu0 %1386
        %1388 = vrot.lane.b32.xlu0 %v991, 64
        %v1389 = vpop.permute.xlu0 %1388
        %1390 = vrot.lane.b32.xlu0 %v992, 64
        %v1391 = vpop.permute.xlu0 %1390
        %1392 = vrot.lane.b32.xlu0 %v993, 64
        %v1393 = vpop.permute.xlu0 %1392
        %1394 = vrot.lane.b32.xlu0 %v994, 64
        %v1395 = vpop.permute.xlu0 %1394
        %1396 = vrot.lane.b32.xlu0 %v995, 64
        %v1397 = vpop.permute.xlu0 %1396
        %1398 = vrot.lane.b32.xlu0 %v996, 64
        %v1399 = vpop.permute.xlu0 %1398
        %1408 = vmatpush.bf16.msra.mxu0 %v1399
        %1409 = vmatpush.bf16.msra.mxu0 %v1397
        %1410 = vmatpush.bf16.msra.mxu0 %v1395
        %1411 = vmatpush.bf16.msra.mxu0 %v1393
        %1412 = vmatpush.bf16.msra.mxu0 %v1391
        %1413 = vmatpush.bf16.msra.mxu0 %v1389
        %1414 = vmatpush.bf16.msra.mxu0 %v1387
        %1415 = vmatpush.bf16.msra.mxu0 %v1385
        %1416 = vmatmul.bf16.gmra.mxu0 %v1376
        %v1417 = vpop.f32.mrf.mxu0
        %v1418 = vadd.f32 0.0, %v1417
        %v1419 = vpop.f32.mrf.mxu0
        %v1420 = vadd.f32 0.0, %v1419
        %1421 = vmatmul.bf16.gmra.mxu0 %v1377
        %v1422 = vpop.f32.mrf.mxu0
        %v1423 = vadd.f32 0.0, %v1422
        %v1424 = vpop.f32.mrf.mxu0
        %v1425 = vadd.f32 0.0, %v1424
        %1426 = vmatmul.bf16.gmra.mxu0 %v1378
        %v1427 = vpop.f32.mrf.mxu0
        %v1428 = vadd.f32 0.0, %v1427
        %v1429 = vpop.f32.mrf.mxu0
        %v1430 = vadd.f32 0.0, %v1429
        %1431 = vmatmul.bf16.gmra.mxu0 %v1379
        %v1432 = vpop.f32.mrf.mxu0
        %v1433 = vadd.f32 0.0, %v1432
        %v1434 = vpop.f32.mrf.mxu0
        %v1435 = vadd.f32 0.0, %v1434
        %1436 = vmatmul.bf16.gmra.mxu0 %v1380
        %v1437 = vpop.f32.mrf.mxu0
        %v1438 = vadd.f32 0.0, %v1437
        %v1439 = vpop.f32.mrf.mxu0
        %v1440 = vadd.f32 0.0, %v1439
        %1441 = vmatmul.bf16.gmra.mxu0 %v1381
        %v1442 = vpop.f32.mrf.mxu0
        %v1443 = vadd.f32 0.0, %v1442
        %v1444 = vpop.f32.mrf.mxu0
        %v1445 = vadd.f32 0.0, %v1444
        %1446 = vmatmul.bf16.gmra.mxu0 %v1382
        %v1447 = vpop.f32.mrf.mxu0
        %v1448 = vadd.f32 0.0, %v1447
        %v1449 = vpop.f32.mrf.mxu0
        %v1450 = vadd.f32 0.0, %v1449
        %1451 = vmatmul.bf16.gmra.mxu0 %v1383
        %v1452 = vpop.f32.mrf.mxu0
        %v1453 = vadd.f32 0.0, %v1452
        %v1454 = vpop.f32.mrf.mxu0
        %v1455 = vadd.f32 0.0, %v1454
        %1456 = vdwg.mxu0
        %v1457 = vrcp.pop %v1345
        %v1458 = vrcp.pop %v1347
        %v1459 = vrcp.pop %v1349
        %v1460 = vrcp.pop %v1351
        %v1461 = vrcp.pop %v1353
        %v1462 = vrcp.pop %v1355
        %v1463 = vrcp.pop %v1357
        %v1464 = vrcp.pop %v1359
        %v1465 = vrcp.pop %v1361
        %v1466 = vrcp.pop %v1363
        %v1467 = vrcp.pop %v1365
        %v1468 = vrcp.pop %v1367
        %v1469 = vrcp.pop %v1369
        %v1470 = vrcp.pop %v1371
        %v1471 = vrcp.pop %v1373
        %v1472 = vrcp.pop %v1375
        %v1473 = vmul.f32 %v1418, %v1457
        %v1474 = vmul.f32 %v1420, %v1458
        %v1475 = vmul.f32 %v1423, %v1459
        %v1476 = vmul.f32 %v1425, %v1460
        %v1477 = vmul.f32 %v1428, %v1461
        %v1478 = vmul.f32 %v1430, %v1462
        %v1479 = vmul.f32 %v1433, %v1463
        %v1480 = vmul.f32 %v1435, %v1464
        %v1481 = vmul.f32 %v1438, %v1465
        %v1482 = vmul.f32 %v1440, %v1466
        %v1483 = vmul.f32 %v1443, %v1467
        %v1484 = vmul.f32 %v1445, %v1468
        %v1485 = vmul.f32 %v1448, %v1469
        %v1486 = vmul.f32 %v1450, %v1470
        %v1487 = vmul.f32 %v1453, %v1471
        %v1488 = vmul.f32 %v1455, %v1472
        %v1489 = vpack.c.bf16 %v1473, %v1473
        %v1490 = vpack.c.bf16 %v1474, %v1474
        %v1491 = vpack.c.bf16 %v1475, %v1475
        %v1492 = vpack.c.bf16 %v1476, %v1476
        %v1493 = vpack.c.bf16 %v1477, %v1477
        %v1494 = vpack.c.bf16 %v1478, %v1478
        %v1495 = vpack.c.bf16 %v1479, %v1479
        %v1496 = vpack.c.bf16 %v1480, %v1480
        %v1497 = vpack.c.bf16 %v1481, %v1481
        %v1498 = vpack.c.bf16 %v1482, %v1482
        %v1499 = vpack.c.bf16 %v1483, %v1483
        %v1500 = vpack.c.bf16 %v1484, %v1484
        %v1501 = vpack.c.bf16 %v1485, %v1485
        %v1502 = vpack.c.bf16 %v1486, %v1486
        %v1503 = vpack.c.bf16 %v1487, %v1487
        %v1504 = vpack.c.bf16 %v1488, %v1488
        %1521 = vrot.lane.b32.xlu0 %v1489, 64
        %v1522 = vpop.permute.xlu0 %1521
        %1523 = vrot.lane.b32.xlu0 %v1490, 64
        %v1524 = vpop.permute.xlu0 %1523
        %1525 = vrot.lane.b32.xlu0 %v1491, 64
        %v1526 = vpop.permute.xlu0 %1525
        %1527 = vrot.lane.b32.xlu0 %v1492, 64
        %v1528 = vpop.permute.xlu0 %1527
        %1529 = vrot.lane.b32.xlu0 %v1493, 64
        %v1530 = vpop.permute.xlu0 %1529
        %1531 = vrot.lane.b32.xlu0 %v1494, 64
        %v1532 = vpop.permute.xlu0 %1531
        %1533 = vrot.lane.b32.xlu0 %v1495, 64
        %v1534 = vpop.permute.xlu0 %1533
        %1535 = vrot.lane.b32.xlu0 %v1496, 64
        %v1536 = vpop.permute.xlu0 %1535
        %1537 = vrot.lane.b32.xlu0 %v1497, 64
        %v1538 = vpop.permute.xlu0 %1537
        %1539 = vrot.lane.b32.xlu0 %v1498, 64
        %v1540 = vpop.permute.xlu0 %1539
        %1541 = vrot.lane.b32.xlu0 %v1499, 64
        %v1542 = vpop.permute.xlu0 %1541
        %1543 = vrot.lane.b32.xlu0 %v1500, 64
        %v1544 = vpop.permute.xlu0 %1543
        %1545 = vrot.lane.b32.xlu0 %v1501, 64
        %v1546 = vpop.permute.xlu0 %1545
        %1547 = vrot.lane.b32.xlu0 %v1502, 64
        %v1548 = vpop.permute.xlu0 %1547
        %1549 = vrot.lane.b32.xlu0 %v1503, 64
        %v1550 = vpop.permute.xlu0 %1549
        %1551 = vrot.lane.b32.xlu0 %v1504, 64
        %v1552 = vpop.permute.xlu0 %1551
        %vm1569 = vcmask 1043968
        %1570 = vst.msk [vmem:[#allocation2] sm:$0xf] %vm1569, %v1522
        %1571 = vst.msk [vmem:[#allocation2 + $0x4] sm:$0xf] %vm1569, %v1524
        %1572 = vst.msk [vmem:[#allocation2 + $0x8] sm:$0xf] %vm1569, %v1526
        %1573 = vst.msk [vmem:[#allocation2 + $0xc] sm:$0xf] %vm1569, %v1528
        %1574 = vst.msk [vmem:[#allocation2 + $0x10] sm:$0xf] %vm1569, %v1530
        %1575 = vst.msk [vmem:[#allocation2 + $0x14] sm:$0xf] %vm1569, %v1532
        %1576 = vst.msk [vmem:[#allocation2 + $0x18] sm:$0xf] %vm1569, %v1534
        %1577 = vst.msk [vmem:[#allocation2 + $0x1c] sm:$0xf] %vm1569, %v1536
        %1578 = vst.msk [vmem:[#allocation2 + $0x20] sm:$0xf] %vm1569, %v1538
        %1579 = vst.msk [vmem:[#allocation2 + $0x24] sm:$0xf] %vm1569, %v1540
        %1580 = vst.msk [vmem:[#allocation2 + $0x28] sm:$0xf] %vm1569, %v1542
        %1581 = vst.msk [vmem:[#allocation2 + $0x2c] sm:$0xf] %vm1569, %v1544
        %1582 = vst.msk [vmem:[#allocation2 + $0x30] sm:$0xf] %vm1569, %v1546
        %1583 = vst.msk [vmem:[#allocation2 + $0x34] sm:$0xf] %vm1569, %v1548
        %1584 = vst.msk [vmem:[#allocation2 + $0x38] sm:$0xf] %vm1569, %v1550
        %1585 = vst.msk [vmem:[#allocation2 + $0x3c] sm:$0xf] %vm1569, %v1552
        %v1586 = vld [vmem:[#allocation2] sm:$0xf]
        %v1587 = vld [vmem:[#allocation2 + $0x4] sm:$0xf]
        %v1588 = vld [vmem:[#allocation2 + $0x8] sm:$0xf]
        %v1589 = vld [vmem:[#allocation2 + $0xc] sm:$0xf]
        %v1590 = vld [vmem:[#allocation2 + $0x10] sm:$0xf]
        %v1591 = vld [vmem:[#allocation2 + $0x14] sm:$0xf]
        %v1592 = vld [vmem:[#allocation2 + $0x18] sm:$0xf]
        %v1593 = vld [vmem:[#allocation2 + $0x1c] sm:$0xf]
        %v1594 = vld [vmem:[#allocation2 + $0x20] sm:$0xf]
        %v1595 = vld [vmem:[#allocation2 + $0x24] sm:$0xf]
        %v1596 = vld [vmem:[#allocation2 + $0x28] sm:$0xf]
        %v1597 = vld [vmem:[#allocation2 + $0x2c] sm:$0xf]
        %v1598 = vld [vmem:[#allocation2 + $0x30] sm:$0xf]
        %v1599 = vld [vmem:[#allocation2 + $0x34] sm:$0xf]
        %v1600 = vld [vmem:[#allocation2 + $0x38] sm:$0xf]
        %v1601 = vld [vmem:[#allocation2 + $0x3c] sm:$0xf]
        %v1602 = vld [vmem:[#allocation8] sm:$0xf]
        %v1603 = vld [vmem:[#allocation8 + $0x4] sm:$0xf]
        %v1604 = vld [vmem:[#allocation8 + $0x8] sm:$0xf]
        %v1605 = vld [vmem:[#allocation8 + $0xc] sm:$0xf]
        %v1606 = vld [vmem:[#allocation8 + $0x10] sm:$0xf]
        %v1607 = vld [vmem:[#allocation8 + $0x14] sm:$0xf]
        %v1608 = vld [vmem:[#allocation8 + $0x18] sm:$0xf]
        %v1609 = vld [vmem:[#allocation8 + $0x1c] sm:$0xf]
        %v1610 = vld [vmem:[#allocation8 + $0x20] sm:$0xf]
        %v1611 = vld [vmem:[#allocation8 + $0x24] sm:$0xf]
        %v1612 = vld [vmem:[#allocation8 + $0x28] sm:$0xf]
        %v1613 = vld [vmem:[#allocation8 + $0x2c] sm:$0xf]
        %v1614 = vld [vmem:[#allocation8 + $0x30] sm:$0xf]
        %v1615 = vld [vmem:[#allocation8 + $0x34] sm:$0xf]
        %v1616 = vld [vmem:[#allocation8 + $0x38] sm:$0xf]
        %v1617 = vld [vmem:[#allocation8 + $0x3c] sm:$0xf]
        %v1618 = vld [vmem:[%s3] sm:$0x1]
        %v1620 = vperm.slane %v1618, 0
        %v1638 = vunpack.c.l.b16 %v1586
        %v1639 = vunpack.c.l.b16 %v1587
        %v1640 = vunpack.c.l.b16 %v1588
        %v1641 = vunpack.c.l.b16 %v1589
        %v1642 = vunpack.c.l.b16 %v1590
        %v1643 = vunpack.c.l.b16 %v1591
        %v1644 = vunpack.c.l.b16 %v1592
        %v1645 = vunpack.c.l.b16 %v1593
        %v1646 = vunpack.c.l.b16 %v1594
        %v1647 = vunpack.c.l.b16 %v1595
        %v1648 = vunpack.c.l.b16 %v1596
        %v1649 = vunpack.c.l.b16 %v1597
        %v1650 = vunpack.c.l.b16 %v1598
        %v1651 = vunpack.c.l.b16 %v1599
        %v1652 = vunpack.c.l.b16 %v1600
        %v1653 = vunpack.c.l.b16 %v1601
        %v1654 = vpack.c.b16 %v1639, %v1638
        %v1655 = vpack.c.b16 %v1641, %v1640
        %v1656 = vpack.c.b16 %v1643, %v1642
        %v1657 = vpack.c.b16 %v1645, %v1644
        %v1658 = vpack.c.b16 %v1647, %v1646
        %v1659 = vpack.c.b16 %v1649, %v1648
        %v1660 = vpack.c.b16 %v1651, %v1650
        %v1661 = vpack.c.b16 %v1653, %v1652
        %v1686 = vunpack.c.l.b16 %v1602
        %v1687 = vunpack.c.l.b16 %v1603
        %v1688 = vunpack.c.l.b16 %v1604
        %v1689 = vunpack.c.l.b16 %v1605
        %v1690 = vunpack.c.l.b16 %v1606
        %v1691 = vunpack.c.l.b16 %v1607
        %v1692 = vunpack.c.l.b16 %v1608
        %v1693 = vunpack.c.l.b16 %v1609
        %v1694 = vunpack.c.l.b16 %v1610
        %v1695 = vunpack.c.l.b16 %v1611
        %v1696 = vunpack.c.l.b16 %v1612
        %v1697 = vunpack.c.l.b16 %v1613
        %v1698 = vunpack.c.l.b16 %v1614
        %v1699 = vunpack.c.l.b16 %v1615
        %v1700 = vunpack.c.l.b16 %v1616
        %v1701 = vunpack.c.l.b16 %v1617
        %v1702 = vpack.c.b16 %v1687, %v1686
        %v1703 = vpack.c.b16 %v1689, %v1688
        %v1704 = vpack.c.b16 %v1691, %v1690
        %v1705 = vpack.c.b16 %v1693, %v1692
        %v1706 = vpack.c.b16 %v1695, %v1694
        %v1707 = vpack.c.b16 %v1697, %v1696
        %v1708 = vpack.c.b16 %v1699, %v1698
        %v1709 = vpack.c.b16 %v1701, %v1700
        %1718 = vmatpush.bf16.msra.mxu0 %v1709
        %1719 = vmatpush.bf16.msra.mxu0 %v1708
        %1720 = vmatpush.bf16.msra.mxu0 %v1707
        %1721 = vmatpush.bf16.msra.mxu0 %v1706
        %1722 = vmatpush.bf16.msra.mxu0 %v1705
        %1723 = vmatpush.bf16.msra.mxu0 %v1704
        %1724 = vmatpush.bf16.msra.mxu0 %v1703
        %1725 = vmatpush.bf16.msra.mxu0 %v1702
        %1726 = vmatmul.bf16.gmra.mxu0 %v1654
        %v1727 = vpop.f32.mrf.mxu0
        %v1728 = vadd.f32 %v1620, %v1727
        %v1729 = vpop.f32.mrf.mxu0
        %v1730 = vadd.f32 %v1620, %v1729
        %1731 = vmatmul.bf16.gmra.mxu0 %v1655
        %v1732 = vpop.f32.mrf.mxu0
        %v1733 = vadd.f32 %v1620, %v1732
        %v1734 = vpop.f32.mrf.mxu0
        %v1735 = vadd.f32 %v1620, %v1734
        %1736 = vmatmul.bf16.gmra.mxu0 %v1656
        %v1737 = vpop.f32.mrf.mxu0
        %v1738 = vadd.f32 %v1620, %v1737
        %v1739 = vpop.f32.mrf.mxu0
        %v1740 = vadd.f32 %v1620, %v1739
        %1741 = vmatmul.bf16.gmra.mxu0 %v1657
        %v1742 = vpop.f32.mrf.mxu0
        %v1743 = vadd.f32 %v1620, %v1742
        %v1744 = vpop.f32.mrf.mxu0
        %v1745 = vadd.f32 %v1620, %v1744
        %1746 = vmatmul.bf16.gmra.mxu0 %v1658
        %v1747 = vpop.f32.mrf.mxu0
        %v1748 = vadd.f32 %v1620, %v1747
        %v1749 = vpop.f32.mrf.mxu0
        %v1750 = vadd.f32 %v1620, %v1749
        %1751 = vmatmul.bf16.gmra.mxu0 %v1659
        %v1752 = vpop.f32.mrf.mxu0
        %v1753 = vadd.f32 %v1620, %v1752
        %v1754 = vpop.f32.mrf.mxu0
        %v1755 = vadd.f32 %v1620, %v1754
        %1756 = vmatmul.bf16.gmra.mxu0 %v1660
        %v1757 = vpop.f32.mrf.mxu0
        %v1758 = vadd.f32 %v1620, %v1757
        %v1759 = vpop.f32.mrf.mxu0
        %v1760 = vadd.f32 %v1620, %v1759
        %1761 = vmatmul.bf16.gmra.mxu0 %v1661
        %v1762 = vpop.f32.mrf.mxu0
        %v1763 = vadd.f32 %v1620, %v1762
        %v1764 = vpop.f32.mrf.mxu0
        %v1765 = vadd.f32 %v1620, %v1764
        %1766 = vdwg.mxu0
        %1767 = vst [vmem:[%s250] sm:$0xff] %v1728
        %1768 = vst [vmem:[%s250 + $0x8] sm:$0xff] %v1730
        %1769 = vst [vmem:[%s250 + $0x10] sm:$0xff] %v1733
        %1770 = vst [vmem:[%s250 + $0x18] sm:$0xff] %v1735
        %1771 = vst [vmem:[%s250 + $0x20] sm:$0xff] %v1738
        %1772 = vst [vmem:[%s250 + $0x28] sm:$0xff] %v1740
        %1773 = vst [vmem:[%s250 + $0x30] sm:$0xff] %v1743
        %1774 = vst [vmem:[%s250 + $0x38] sm:$0xff] %v1745
        %1775 = vst [vmem:[%s250 + $0x40] sm:$0xff] %v1748
        %1776 = vst [vmem:[%s250 + $0x48] sm:$0xff] %v1750
        %1777 = vst [vmem:[%s250 + $0x50] sm:$0xff] %v1753
        %1778 = vst [vmem:[%s250 + $0x58] sm:$0xff] %v1755
        %1779 = vst [vmem:[%s250 + $0x60] sm:$0xff] %v1758
        %1780 = vst [vmem:[%s250 + $0x68] sm:$0xff] %v1760
        %1781 = vst [vmem:[%s250 + $0x70] sm:$0xff] %v1763
        %1782 = vst [vmem:[%s250 + $0x78] sm:$0xff] %v1765
        %s1783 = sand.u32 %s119, 1
        %s1784 = scalar_lea.sflag [#allocation5], %s1783
        %s1785 = sand.u32 %s119, 1
        %s1786 = smul.addr %s1785, 128
        %s1787 = scalar_lea.vmem [#allocation9], %s1786
        // Predicated region
        $region49: #{tpu_custom_call.1} parent=35 // pred_check
          %p1788 = pneg %p129
        $region50: #{tpu_custom_call.1} parent=35 // pred_check_branch
          %1790 = sbr.rel (%p1788) target = $region52
        $region51: #{tpu_custom_call.1} parent=35 // pred_region
          %1792 = vsyncadd %s1784, 0
          %s1793 = smul.addr %s22, 16
          %s1794 = smul.addr %s1793, 8
          %s1795 = scalar_lea.hbm %s4, %s1794
          %s1796 = sshll.u32 %s1787, 4
          %s1797 = int_to_ptr.vmem [resolvable:$true] %s1796
          %s1798 = sshll.u32 %s1795, 4
          %s1799 = int_to_ptr.hbm [resolvable:$true] %s1798
          %1804 = dma.vmem_to_hbm [thread:$0]  %s1797, 2048, %s1799, %s1784, 128, 128, 8
        $region52: #{tpu_custom_call.1} parent=35 // pred_fallthru
          _
      $region36: #{tpu_custom_call.1} parent=5 // pred_fallthru
        _
      %p1805 = scmp.le.s32.totalorder 2, %s17
      // Predicated region
      $region53: #{tpu_custom_call.1} parent=5 // pred_check
        %p1806 = pneg %p1805
      $region54: #{tpu_custom_call.1} parent=5 // pred_check_branch
        %1808 = sbr.rel (%p1806) target = $region56
      $region55: #{tpu_custom_call.1} parent=5 // pred_region
        %s1809 = ssub.s32 %s17, 2
        // Predicated region
        $region57: #{tpu_custom_call.1} parent=55 // pred_check
          %p1810 = pneg %p135
        $region58: #{tpu_custom_call.1} parent=55 // pred_check_branch
          %1812 = sbr.rel (%p1810) target = $region60
        $region59: #{tpu_custom_call.1} parent=55 // pred_region
          %s1813 = sand.u32 %s120, 1
          %s1814 = scalar_lea.sflag [#allocation5], %s1813
          %s1815 = sand.u32 %s120, 1
          %s1816 = smul.addr %s1815, 128
          %s1817 = scalar_lea.vmem [#allocation9], %s1816
          %1819 = dma.done %s1814, 2048
        $region60: #{tpu_custom_call.1} parent=55 // pred_fallthru
          _
      $region56: #{tpu_custom_call.1} parent=5 // pred_fallthru
        _
    $region6: #{tpu_custom_call.1} parent=1 // loop_footer
      %s21 = sadd.s32 1, %s17
    $region7: #{tpu_custom_call.1} parent=1 // loop_footer_branch
      %16 = sbr.rel target = $region3
    $region8: #{tpu_custom_call.1} parent=1 // loop_exit
      _
    %1820 = vsyncpa [#allocation4], 1
    %s1821 = scalar_lea.sflag [#allocation4], 1
    %1822 = vsyncpa %s1821, 1
    %1823 = vsyncpa [#allocation7], 1
    %1824 = vsyncpa [#allocation5], 1
    %s1825 = scalar_lea.sflag [#allocation5], 1
    %1826 = vsyncpa %s1825, 1

</llo_original>
